<compile_context>
chip_gen: v7x
topology: tpu7x:2x2x1
jax: 0.10.0
libtpu: 0.0.40
codegen_flags: <defaults>
</compile_context>

<pallas_src>
import jax
import jax.numpy as jnp
from jax.experimental import pallas as pl
from jax.experimental.pallas import tpu as pltpu

BOARD_SIZE = 6
NUM_PIECE_TYPES = 22
INPUT_CHANNELS = BOARD_SIZE * BOARD_SIZE + 1          # 37
EMBED_SIZE = 8
FLAT_IN = INPUT_CHANNELS * EMBED_SIZE                 # 296
K_PAD = 384                                           # 3 * 128 (lane-aligned fc1 K)
H1, H2, H3 = 256, 512, 256
HEAD = 128                                            # policy_fc1 / value_fc1 width
POLICY_OUT = BOARD_SIZE * BOARD_SIZE                  # 36
VALUE_OUT = 1
OUT_LANES = 128                                       # packed output: [log_policy | value | 0...]


def _round_up(x, m):
    return (x + m - 1) // m * m


# --------------------------------------------------------------------------- #
# Kernel: five bf16 MXU matmuls with f32 accumulation + masked log-softmax.
# --------------------------------------------------------------------------- #
def _net_kernel(x_ref, w1_ref, b1_ref, w2_ref, b2_ref, w3_ref, b3_ref,
                wh_ref, bh_ref, wo_ref, bo_ref, out_ref):
    f32 = jnp.float32
    bf16 = jnp.bfloat16

    def mm(a, w_ref):
        # bf16 operands on the MXU, f32 accumulation.
        return jnp.dot(a, w_ref[...], preferred_element_type=f32)

    x = x_ref[...]                                                # (tb, 384) bf16
    h = jnp.maximum(mm(x, w1_ref) + b1_ref[...], 0.0)             # (tb, 256)  relu(fc1)
    h = jnp.maximum(mm(h.astype(bf16), w2_ref) + b2_ref[...], 0.0)   # (tb, 512)
    h = jnp.maximum(mm(h.astype(bf16), w3_ref) + b3_ref[...], 0.0)   # (tb, 256)

    # fused heads: [policy_fc1 | value_fc1] then packed [policy_fc2 | value_fc2]
    hv = jnp.maximum(mm(h.astype(bf16), wh_ref) + bh_ref[...], 0.0)  # (tb, 256)
    y = mm(hv.astype(bf16), wo_ref) + bo_ref[...]                    # (tb, 128)

    # masked log_softmax over the 36 logit lanes; keep the value at lane 36
    lane = jax.lax.broadcasted_iota(jnp.int32, y.shape, 1)
    is_logit = lane < POLICY_OUT
    m = jnp.max(jnp.where(is_logit, y, -jnp.inf), axis=1, keepdims=True)
    shifted = y - m
    e = jnp.where(is_logit, jnp.exp(shifted), 0.0)
    lse = jnp.log(jnp.sum(e, axis=1, keepdims=True))
    out_ref[...] = jnp.where(is_logit, shifted - lse, y)


# --------------------------------------------------------------------------- #
# Parameter preparation (head packing / padding / bf16 casts).
# Call ONCE and reuse — do not fold this into the per-step forward.
# --------------------------------------------------------------------------- #
def prepare_params(params):
    bf16 = jnp.bfloat16

    # fc1 weight padded along K (296 -> 384) so the gathered embeddings feed a
    # lane-aligned matmul.
    w1 = jnp.pad(params["w1"], ((0, K_PAD - FLAT_IN), (0, 0)))

    w_head = jnp.concatenate([params["pw1"], params["vw1"]], axis=1)         # (256, 256)
    b_head = jnp.concatenate([params["pb1"], params["vb1"]], axis=1)         # (1, 256)

    w_out = jnp.zeros((2 * HEAD, OUT_LANES), jnp.float32)
    w_out = w_out.at[:HEAD, :POLICY_OUT].set(params["pw2"])                  # policy_fc2
    w_out = w_out.at[HEAD:, POLICY_OUT:POLICY_OUT + 1].set(params["vw2"])    # value_fc2
    b_out = jnp.zeros((1, OUT_LANES), jnp.float32)
    b_out = b_out.at[:, :POLICY_OUT].set(params["pb2"])
    b_out = b_out.at[:, POLICY_OUT:POLICY_OUT + 1].set(params["vb2"])

    return dict(
        emb=params["embedding"].astype(bf16),
        w1=w1.astype(bf16), b1=params["b1"],
        w2=params["w2"].astype(bf16), b2=params["b2"],
        w3=params["w3"].astype(bf16), b3=params["b3"],
        w_head=w_head.astype(bf16), b_head=b_head,
        w_out=w_out.astype(bf16), b_out=b_out,
    )


def _choose_tile(B, block_b):
    """Batch tile: multiple of 16 (bf16 sublane packing); >=2 grid steps for
    large batches so v7x's two TensorCores both get work."""
    if block_b % 16 != 0:
        raise ValueError("block_b must be a multiple of 16")
    b16 = _round_up(B, 16)
    tb = min(block_b, b16)
    if tb >= b16 and B >= 512:
        # whole (large) batch would fit one tile -> split into two ~256-aligned
        # tiles so dimension_semantics=("parallel",) can shard across TCs (v7x).
        tb = min(b16, max(256, _round_up((b16 + 1) // 2, 256)))
    return tb


# --------------------------------------------------------------------------- #
# Wrapper
# --------------------------------------------------------------------------- #
def triple_town_forward(state_ids, prepared, *, block_b=512):
    """state_ids: (B, 37) int32 piece ids.  `prepared` = prepare_params(params)
    (computed once).  Returns (log_policy (B, 36), value (B, 1))."""
    kp = prepared
    B = state_ids.shape[0]
    tb = _choose_tile(B, block_b)
    b_pad = _round_up(B, tb)

    # Tiny embedding gather in the wrapper (22x8 table), flattened and padded
    # to a lane-aligned K; bf16 feeds the MXU directly inside the kernel.
    x = jnp.take(kp["emb"], state_ids, axis=0).reshape(B, FLAT_IN)           # (B, 296) bf16
    x = jnp.pad(x, ((0, b_pad - B), (0, K_PAD - FLAT_IN)))                   # (b_pad, 384)

    row = lambda i: (i, 0)
    const = lambda i: (0, 0)   # weights: same block every step -> DMA'd once, VMEM-resident
    # NOTE: pipeline_mode=pl.Buffered(1) on the constant-index weight specs
    # would halve their VMEM footprint (~0.7 MB saved); left at the default
    # double-buffering for portability since VMEM headroom is ample here.

    out = pl.pallas_call(
        _net_kernel,
        out_shape=jax.ShapeDtypeStruct((b_pad, OUT_LANES), jnp.float32),
        grid=(b_pad // tb,),
        in_specs=[
            pl.BlockSpec((tb, K_PAD), row),              # gathered embeddings (bf16)
            pl.BlockSpec((K_PAD, H1), const),            # fc1 (K-padded)
            pl.BlockSpec((1, H1), const),
            pl.BlockSpec((H1, H2), const),               # fc2
            pl.BlockSpec((1, H2), const),
            pl.BlockSpec((H2, H3), const),               # fc3
            pl.BlockSpec((1, H3), const),
            pl.BlockSpec((H3, 2 * HEAD), const),         # [policy_fc1 | value_fc1]
            pl.BlockSpec((1, 2 * HEAD), const),
            pl.BlockSpec((2 * HEAD, OUT_LANES), const),  # packed [policy_fc2 | value_fc2]
            pl.BlockSpec((1, OUT_LANES), const),
        ],
        out_specs=pl.BlockSpec((tb, OUT_LANES), row),
        compiler_params=pltpu.CompilerParams(
            dimension_semantics=("parallel",)),          # v7x: batch grid across both TCs
    )(x, kp["w1"], kp["b1"], kp["w2"], kp["b2"], kp["w3"], kp["b3"],
      kp["w_head"], kp["b_head"], kp["w_out"], kp["b_out"])

    log_policy = out[:B, :POLICY_OUT]
    value = out[:B, POLICY_OUT:POLICY_OUT + 1]
    return log_policy, value


# --------------------------------------------------------------------------- #
# Parameters + references
# --------------------------------------------------------------------------- #
def init_params(key):
    """Deterministic synthetic parameters (shapes match the PyTorch module)."""
    keys = jax.random.split(key, 16)

    def dense_init(kw, kb, fan_in, fan_out):
        scale = 1.0 / jnp.sqrt(jnp.float32(fan_in))
        w = jax.random.normal(kw, (fan_in, fan_out), jnp.float32) * scale
        b = jax.random.normal(kb, (1, fan_out), jnp.float32) * scale
        return w, b

    params = {}
    params["embedding"] = jax.random.normal(
        keys[0], (NUM_PIECE_TYPES, EMBED_SIZE), jnp.float32)
    params["w1"], params["b1"] = dense_init(keys[1], keys[2], FLAT_IN, H1)
    params["w2"], params["b2"] = dense_init(keys[3], keys[4], H1, H2)
    params["w3"], params["b3"] = dense_init(keys[5], keys[6], H2, H3)
    params["pw1"], params["pb1"] = dense_init(keys[7], keys[8], H3, HEAD)
    params["pw2"], params["pb2"] = dense_init(keys[9], keys[10], HEAD, POLICY_OUT)
    params["vw1"], params["vb1"] = dense_init(keys[11], keys[12], H3, HEAD)
    params["vw2"], params["vb2"] = dense_init(keys[13], keys[14], HEAD, VALUE_OUT)
    return params


def reference_f32(state_ids, params):
    """Original module structure, full f32 (embedding gather + MLP + heads)."""
    B = state_ids.shape[0]
    x = jnp.take(params["embedding"], state_ids, axis=0).reshape(B, FLAT_IN)

    def dense(h, w, b, relu=True):
        y = h @ w + b
        return jnp.maximum(y, 0.0) if relu else y

    h = dense(x, params["w1"], params["b1"])
    h = dense(h, params["w2"], params["b2"])
    h = dense(h, params["w3"], params["b3"])
    p = dense(h, params["pw1"], params["pb1"])
    logits = dense(p, params["pw2"], params["pb2"], relu=False)
    v = dense(h, params["vw1"], params["vb1"])
    value = dense(v, params["vw2"], params["vb2"], relu=False)
    return jax.nn.log_softmax(logits, axis=1), value


def reference_quantized(state_ids, kp):
    """Mirrors the kernel math exactly (bf16 gather/operands, fused heads)."""
    B = state_ids.shape[0]
    x = jnp.take(kp["emb"], state_ids, axis=0).reshape(B, FLAT_IN)
    x = jnp.pad(x, ((0, 0), (0, K_PAD - FLAT_IN)))

    def mm(a, w):
        return jnp.dot(a.astype(jnp.bfloat16), w, preferred_element_type=jnp.float32)

    h = jnp.maximum(mm(x, kp["w1"]) + kp["b1"], 0.0)
    h = jnp.maximum(mm(h, kp["w2"]) + kp["b2"], 0.0)
    h = jnp.maximum(mm(h, kp["w3"]) + kp["b3"], 0.0)
    hv = jnp.maximum(mm(h, kp["w_head"]) + kp["b_head"], 0.0)
    y = mm(hv, kp["w_out"]) + kp["b_out"]
    log_policy = jax.nn.log_softmax(y[:, :POLICY_OUT], axis=1)
    value = y[:, POLICY_OUT:POLICY_OUT + 1]
    return log_policy, value


# --------------------------------------------------------------------------- #
if __name__ == "__main__":
    key = jax.random.PRNGKey(0)
    k_state, k_params = jax.random.split(key)

    B = 50                                            # exercises 16-row padding
    state = jax.random.randint(k_state, (B, INPUT_CHANNELS), 0, NUM_PIECE_TYPES,
                               dtype=jnp.int32)
    params = init_params(k_params)

    # Fold / pack / cast weights ONCE (hoisted out of the forward).
    kp = prepare_params(params)
    jax.block_until_ready(kp)

    fwd = jax.jit(triple_town_forward, static_argnames=("block_b",))

    # block_b=16 -> 4 grid steps: exercises the multi-tile path with
    # VMEM-resident weights (production would use the default 512).
    log_policy, value = fwd(state, kp, block_b=16)
    jax.block_until_ready((log_policy, value))
    assert log_policy.shape == (B, POLICY_OUT) and value.shape == (B, VALUE_OUT)

    # Default (single-tile at this small batch) path must agree exactly.
    lp1, v1 = fwd(state, kp)
    jax.block_until_ready((lp1, v1))
    assert jnp.allclose(lp1, log_policy, atol=1e-4, rtol=1e-4)
    assert jnp.allclose(v1, value, atol=1e-4, rtol=1e-4)

    # Tight check against a reference that mirrors the kernel's bf16 math.
    ref_lp_q, ref_v_q = reference_quantized(state, kp)
    assert jnp.allclose(log_policy, ref_lp_q, atol=2e-2, rtol=2e-2)
    assert jnp.allclose(value, ref_v_q, atol=2e-2, rtol=2e-2)

    # Loose check against the original-structure f32 forward (gap = bf16 weights).
    ref_lp, ref_v = reference_f32(state, params)
    assert jnp.allclose(log_policy, ref_lp, atol=0.3, rtol=0.1)
    assert jnp.allclose(value, ref_v, atol=0.3, rtol=0.1)

    # Policy rows are valid log-distributions.
    assert jnp.allclose(jnp.exp(log_policy).sum(axis=1), 1.0, atol=1e-3)

    print("KERNEL_OK")
</pallas_src>

<mosaic_0001>
module attributes {stable_mosaic.version = 11 : i64} {
  func.func @_net_kernel(%arg0: i32, %arg1: memref<16x384xbf16, #tpu.memory_space<vmem>>, %arg2: memref<384x256xbf16, #tpu.memory_space<vmem>>, %arg3: memref<1x256xf32, #tpu.memory_space<vmem>>, %arg4: memref<256x512xbf16, #tpu.memory_space<vmem>>, %arg5: memref<1x512xf32, #tpu.memory_space<vmem>>, %arg6: memref<512x256xbf16, #tpu.memory_space<vmem>>, %arg7: memref<1x256xf32, #tpu.memory_space<vmem>>, %arg8: memref<256x256xbf16, #tpu.memory_space<vmem>>, %arg9: memref<1x256xf32, #tpu.memory_space<vmem>>, %arg10: memref<256x128xbf16, #tpu.memory_space<vmem>>, %arg11: memref<1x128xf32, #tpu.memory_space<vmem>>, %arg12: memref<16x128xf32, #tpu.memory_space<vmem>>) attributes {dimension_semantics = [#tpu.dimension_semantics<parallel>], iteration_bounds = array<i64: 4>, scalar_prefetch = 0 : i64, scratch_operands = 0 : i64, tpu.core_type = #tpu.core_type<tc>, window_params = [{transform_indices = @transform_0, window_bounds = array<i64: 16, 384>}, {pipeline_mode = #tpu.pipeline_mode<synchronous>, transform_indices = @transform_1, window_bounds = array<i64: 384, 256>}, {pipeline_mode = #tpu.pipeline_mode<synchronous>, transform_indices = @transform_2, window_bounds = array<i64: 1, 256>}, {pipeline_mode = #tpu.pipeline_mode<synchronous>, transform_indices = @transform_3, window_bounds = array<i64: 256, 512>}, {pipeline_mode = #tpu.pipeline_mode<synchronous>, transform_indices = @transform_4, window_bounds = array<i64: 1, 512>}, {pipeline_mode = #tpu.pipeline_mode<synchronous>, transform_indices = @transform_5, window_bounds = array<i64: 512, 256>}, {pipeline_mode = #tpu.pipeline_mode<synchronous>, transform_indices = @transform_6, window_bounds = array<i64: 1, 256>}, {pipeline_mode = #tpu.pipeline_mode<synchronous>, transform_indices = @transform_7, window_bounds = array<i64: 256, 256>}, {pipeline_mode = #tpu.pipeline_mode<synchronous>, transform_indices = @transform_8, window_bounds = array<i64: 1, 256>}, {pipeline_mode = #tpu.pipeline_mode<synchronous>, transform_indices = @transform_9, window_bounds = array<i64: 256, 128>}, {pipeline_mode = #tpu.pipeline_mode<synchronous>, transform_indices = @transform_10, window_bounds = array<i64: 1, 128>}, {transform_indices = @transform_11, window_bounds = array<i64: 16, 128>}]} {
    %c0 = arith.constant 0 : index
    %c0_0 = arith.constant 0 : index
    %0 = vector.load %arg1[%c0, %c0_0] : memref<16x384xbf16, #tpu.memory_space<vmem>>, vector<16x384xbf16>
    %c0_1 = arith.constant 0 : index
    %c0_2 = arith.constant 0 : index
    %1 = vector.load %arg2[%c0_1, %c0_2] : memref<384x256xbf16, #tpu.memory_space<vmem>>, vector<384x256xbf16>
    %cst = arith.constant dense<0.000000e+00> : vector<16x256xf32>
    %2 = tpu.matmul %0, %1, %cst {dimension_numbers = #tpu.dot_dimension_numbers<[1], [0], [0], [1], [0, 0, 1, 1], [], []>} : vector<16x384xbf16>, vector<384x256xbf16>, vector<16x256xf32> -> vector<16x256xf32>
    %c0_3 = arith.constant 0 : index
    %c0_4 = arith.constant 0 : index
    %3 = vector.load %arg3[%c0_3, %c0_4] : memref<1x256xf32, #tpu.memory_space<vmem>>, vector<1x256xf32>
    %4 = vector.broadcast %3 : vector<1x256xf32> to vector<16x256xf32>
    %5 = arith.addf %2, %4 : vector<16x256xf32>
    %cst_5 = arith.constant 0.000000e+00 : f32
    %6 = vector.broadcast %cst_5 : f32 to vector<16x256xf32>
    %7 = arith.maximumf %5, %6 : vector<16x256xf32>
    %8 = arith.truncf %7 : vector<16x256xf32> to vector<16x256xbf16>
    %c0_6 = arith.constant 0 : index
    %c0_7 = arith.constant 0 : index
    %9 = vector.load %arg4[%c0_6, %c0_7] : memref<256x512xbf16, #tpu.memory_space<vmem>>, vector<256x512xbf16>
    %cst_8 = arith.constant dense<0.000000e+00> : vector<16x512xf32>
    %10 = tpu.matmul %8, %9, %cst_8 {dimension_numbers = #tpu.dot_dimension_numbers<[1], [0], [0], [1], [0, 0, 1, 1], [], []>} : vector<16x256xbf16>, vector<256x512xbf16>, vector<16x512xf32> -> vector<16x512xf32>
    %c0_9 = arith.constant 0 : index
    %c0_10 = arith.constant 0 : index
    %11 = vector.load %arg5[%c0_9, %c0_10] : memref<1x512xf32, #tpu.memory_space<vmem>>, vector<1x512xf32>
    %12 = vector.broadcast %11 : vector<1x512xf32> to vector<16x512xf32>
    %13 = arith.addf %10, %12 : vector<16x512xf32>
    %cst_11 = arith.constant 0.000000e+00 : f32
    %14 = vector.broadcast %cst_11 : f32 to vector<16x512xf32>
    %15 = arith.maximumf %13, %14 : vector<16x512xf32>
    %16 = arith.truncf %15 : vector<16x512xf32> to vector<16x512xbf16>
    %c0_12 = arith.constant 0 : index
    %c0_13 = arith.constant 0 : index
    %17 = vector.load %arg6[%c0_12, %c0_13] : memref<512x256xbf16, #tpu.memory_space<vmem>>, vector<512x256xbf16>
    %cst_14 = arith.constant dense<0.000000e+00> : vector<16x256xf32>
    %18 = tpu.matmul %16, %17, %cst_14 {dimension_numbers = #tpu.dot_dimension_numbers<[1], [0], [0], [1], [0, 0, 1, 1], [], []>} : vector<16x512xbf16>, vector<512x256xbf16>, vector<16x256xf32> -> vector<16x256xf32>
    %c0_15 = arith.constant 0 : index
    %c0_16 = arith.constant 0 : index
    %19 = vector.load %arg7[%c0_15, %c0_16] : memref<1x256xf32, #tpu.memory_space<vmem>>, vector<1x256xf32>
    %20 = vector.broadcast %19 : vector<1x256xf32> to vector<16x256xf32>
    %21 = arith.addf %18, %20 : vector<16x256xf32>
    %cst_17 = arith.constant 0.000000e+00 : f32
    %22 = vector.broadcast %cst_17 : f32 to vector<16x256xf32>
    %23 = arith.maximumf %21, %22 : vector<16x256xf32>
    %24 = arith.truncf %23 : vector<16x256xf32> to vector<16x256xbf16>
    %c0_18 = arith.constant 0 : index
    %c0_19 = arith.constant 0 : index
    %25 = vector.load %arg8[%c0_18, %c0_19] : memref<256x256xbf16, #tpu.memory_space<vmem>>, vector<256x256xbf16>
    %cst_20 = arith.constant dense<0.000000e+00> : vector<16x256xf32>
    %26 = tpu.matmul %24, %25, %cst_20 {dimension_numbers = #tpu.dot_dimension_numbers<[1], [0], [0], [1], [0, 0, 1, 1], [], []>} : vector<16x256xbf16>, vector<256x256xbf16>, vector<16x256xf32> -> vector<16x256xf32>
    %c0_21 = arith.constant 0 : index
    %c0_22 = arith.constant 0 : index
    %27 = vector.load %arg9[%c0_21, %c0_22] : memref<1x256xf32, #tpu.memory_space<vmem>>, vector<1x256xf32>
    %28 = vector.broadcast %27 : vector<1x256xf32> to vector<16x256xf32>
    %29 = arith.addf %26, %28 : vector<16x256xf32>
    %cst_23 = arith.constant 0.000000e+00 : f32
    %30 = vector.broadcast %cst_23 : f32 to vector<16x256xf32>
    %31 = arith.maximumf %29, %30 : vector<16x256xf32>
    %32 = arith.truncf %31 : vector<16x256xf32> to vector<16x256xbf16>
    %c0_24 = arith.constant 0 : index
    %c0_25 = arith.constant 0 : index
    %33 = vector.load %arg10[%c0_24, %c0_25] : memref<256x128xbf16, #tpu.memory_space<vmem>>, vector<256x128xbf16>
    %cst_26 = arith.constant dense<0.000000e+00> : vector<16x128xf32>
    %34 = tpu.matmul %32, %33, %cst_26 {dimension_numbers = #tpu.dot_dimension_numbers<[1], [0], [0], [1], [0, 0, 1, 1], [], []>} : vector<16x256xbf16>, vector<256x128xbf16>, vector<16x128xf32> -> vector<16x128xf32>
    %c0_27 = arith.constant 0 : index
    %c0_28 = arith.constant 0 : index
    %35 = vector.load %arg11[%c0_27, %c0_28] : memref<1x128xf32, #tpu.memory_space<vmem>>, vector<1x128xf32>
    %36 = vector.broadcast %35 : vector<1x128xf32> to vector<16x128xf32>
    %37 = arith.addf %34, %36 : vector<16x128xf32>
    %38 = tpu.iota {dimensions = array<i32: 1>} : vector<16x128xi32>
    %c36_i32 = arith.constant 36 : i32
    %39 = vector.broadcast %c36_i32 : i32 to vector<16x128xi32>
    %40 = arith.cmpi slt, %38, %39 : vector<16x128xi32>
    %cst_29 = arith.constant 0xFF800000 : f32
    %41 = vector.broadcast %cst_29 : f32 to vector<16x128xf32>
    %42 = arith.select %40, %37, %41 : vector<16x128xi1>, vector<16x128xf32>
    %cst_30 = arith.constant dense<0xFF800000> : vector<16xf32>
    %43 = vector.multi_reduction <maximumf>, %42, %cst_30 [1] : vector<16x128xf32> to vector<16xf32>
    %44 = vector.shape_cast %43 : vector<16xf32> to vector<16x1xf32>
    %45 = vector.broadcast %44 : vector<16x1xf32> to vector<16x128xf32>
    %46 = arith.subf %37, %45 : vector<16x128xf32>
    %47 = math.exp %46 : vector<16x128xf32>
    %cst_31 = arith.constant 0.000000e+00 : f32
    %48 = vector.broadcast %cst_31 : f32 to vector<16x128xf32>
    %49 = arith.select %40, %47, %48 : vector<16x128xi1>, vector<16x128xf32>
    %cst_32 = arith.constant dense<0.000000e+00> : vector<16xf32>
    %50 = vector.multi_reduction <add>, %49, %cst_32 [1] : vector<16x128xf32> to vector<16xf32>
    %51 = vector.shape_cast %50 : vector<16xf32> to vector<16x1xf32>
    %52 = math.log %51 : vector<16x1xf32>
    %53 = vector.broadcast %52 : vector<16x1xf32> to vector<16x128xf32>
    %54 = arith.subf %46, %53 : vector<16x128xf32>
    %55 = arith.select %40, %54, %37 : vector<16x128xi1>, vector<16x128xf32>
    %c0_33 = arith.constant 0 : index
    %c0_34 = arith.constant 0 : index
    %56 = vector.load %arg12[%c0_33, %c0_34] : memref<16x128xf32, #tpu.memory_space<vmem>>, vector<16x128xf32>
    tpu.vector_store %arg12[%c0_33, %c0_34], %55 {strides = array<i32>} : memref<16x128xf32, #tpu.memory_space<vmem>>, vector<16x128xf32>,
    return
  }
  func.func @transform_0(%arg0: i32) -> (i32, i32) {
    %c0_i32 = arith.constant 0 : i32
    %c0_i32_0 = arith.constant 0 : i32
    return %arg0, %c0_i32 : i32, i32
  }
  func.func @transform_1(%arg0: i32) -> (i32, i32) {
    %c0_i32 = arith.constant 0 : i32
    %c0_i32_0 = arith.constant 0 : i32
    %c0_i32_1 = arith.constant 0 : i32
    return %c0_i32, %c0_i32_0 : i32, i32
  }
  func.func @transform_2(%arg0: i32) -> (i32, i32) {
    %c0_i32 = arith.constant 0 : i32
    %c0_i32_0 = arith.constant 0 : i32
    %c0_i32_1 = arith.constant 0 : i32
    return %c0_i32, %c0_i32_0 : i32, i32
  }
  func.func @transform_3(%arg0: i32) -> (i32, i32) {
    %c0_i32 = arith.constant 0 : i32
    %c0_i32_0 = arith.constant 0 : i32
    %c0_i32_1 = arith.constant 0 : i32
    return %c0_i32, %c0_i32_0 : i32, i32
  }
  func.func @transform_4(%arg0: i32) -> (i32, i32) {
    %c0_i32 = arith.constant 0 : i32
    %c0_i32_0 = arith.constant 0 : i32
    %c0_i32_1 = arith.constant 0 : i32
    return %c0_i32, %c0_i32_0 : i32, i32
  }
  func.func @transform_5(%arg0: i32) -> (i32, i32) {
    %c0_i32 = arith.constant 0 : i32
    %c0_i32_0 = arith.constant 0 : i32
    %c0_i32_1 = arith.constant 0 : i32
    return %c0_i32, %c0_i32_0 : i32, i32
  }
  func.func @transform_6(%arg0: i32) -> (i32, i32) {
    %c0_i32 = arith.constant 0 : i32
    %c0_i32_0 = arith.constant 0 : i32
    %c0_i32_1 = arith.constant 0 : i32
    return %c0_i32, %c0_i32_0 : i32, i32
  }
  func.func @transform_7(%arg0: i32) -> (i32, i32) {
    %c0_i32 = arith.constant 0 : i32
    %c0_i32_0 = arith.constant 0 : i32
    %c0_i32_1 = arith.constant 0 : i32
    return %c0_i32, %c0_i32_0 : i32, i32
  }
  func.func @transform_8(%arg0: i32) -> (i32, i32) {
    %c0_i32 = arith.constant 0 : i32
    %c0_i32_0 = arith.constant 0 : i32
    %c0_i32_1 = arith.constant 0 : i32
    return %c0_i32, %c0_i32_0 : i32, i32
  }
  func.func @transform_9(%arg0: i32) -> (i32, i32) {
    %c0_i32 = arith.constant 0 : i32
    %c0_i32_0 = arith.constant 0 : i32
    %c0_i32_1 = arith.constant 0 : i32
    return %c0_i32, %c0_i32_0 : i32, i32
  }
  func.func @transform_10(%arg0: i32) -> (i32, i32) {
    %c0_i32 = arith.constant 0 : i32
    %c0_i32_0 = arith.constant 0 : i32
    %c0_i32_1 = arith.constant 0 : i32
    return %c0_i32, %c0_i32_0 : i32, i32
  }
  func.func @transform_11(%arg0: i32) -> (i32, i32) {
    %c0_i32 = arith.constant 0 : i32
    %c0_i32_0 = arith.constant 0 : i32
    return %arg0, %c0_i32 : i32, i32
  }
}

</mosaic_0001>

<llo_original>
// kernel: triple_town_forward.1
$region0: #{triple_town_forward.1}
  #allocation0 [shape = 'u32[]', space=smem, size = 0x4, offset = 0x4, fixed_abs, tag = 'smem constant byte address 0x4 - core index']
  #allocation1 [shape = 'u32[144,128]{1,0:T(1,128)}', space=vmem, size = 0x12000, scoped, tag = 'internal scratch']
  %s0 = inlined_call_operand.vmem [shape: bf16[64,384], index: 0, kind: input, shape index: {}]
  %s1 = inlined_call_operand.vmem [shape: bf16[384,256], index: 1, kind: input, shape index: {}]
  %s2 = inlined_call_operand.vmem [shape: f32[1,256], index: 2, kind: input, shape index: {}]
  %s3 = inlined_call_operand.vmem [shape: bf16[256,512], index: 3, kind: input, shape index: {}]
  %s4 = inlined_call_operand.vmem [shape: f32[1,512], index: 4, kind: input, shape index: {}]
  %s5 = inlined_call_operand.vmem [shape: bf16[512,256], index: 5, kind: input, shape index: {}]
  %s6 = inlined_call_operand.vmem [shape: f32[1,256], index: 6, kind: input, shape index: {}]
  %s7 = inlined_call_operand.vmem [shape: bf16[256,256], index: 7, kind: input, shape index: {}]
  %s8 = inlined_call_operand.vmem [shape: f32[1,256], index: 8, kind: input, shape index: {}]
  %s9 = inlined_call_operand.vmem [shape: bf16[256,128], index: 9, kind: input, shape index: {}]
  %s10 = inlined_call_operand.vmem [shape: f32[1,128], index: 10, kind: input, shape index: {}]
  %s11 = inlined_call_operand.vmem [shape: f32[64,128], index: 11, kind: output, shape index: {}]
  %s12 = sld [smem:[#allocation0]]
  $region77: #{triple_town_forward.1} parent=0
    _
  %s14 = ssub.s32 1, %s12
  %s15 = scalar_select 0, %s14, %s12
  loop: start=0, step=1, limit=6
  $region2: #{triple_town_forward.1} parent=0 // loop_pre_header
    _
  $region3: #{triple_town_forward.1} parent=0 // loop_header
    %s17 = sphi 0, %s21
    %p18 = scmp.ge.s32.totalorder %s17, 6
    %s27 = sphi 0, %s29
    %s30 = sphi 0, %s27
    %s31 = sphi 0, %s30
    %s47 = sphi 0, %s31
    %s51 = sphi 0, %s51
    %s53 = sphi 0, %s51
    %s54 = sphi 0, %s53
    %s68 = sphi 0, %s54
    %s72 = sphi 0, %s72
    %s74 = sphi 0, %s72
    %s75 = sphi 0, %s74
    %s89 = sphi 0, %s75
    %s93 = sphi 0, %s93
    %s95 = sphi 0, %s93
    %s96 = sphi 0, %s95
    %s110 = sphi 0, %s96
    %s114 = sphi 0, %s114
    %s116 = sphi 0, %s114
    %s117 = sphi 0, %s116
    %s131 = sphi 0, %s117
    %s135 = sphi 0, %s135
    %s137 = sphi 0, %s135
    %s138 = sphi 0, %s137
    %s152 = sphi 0, %s138
    %s156 = sphi 0, %s156
    %s158 = sphi 0, %s156
    %s159 = sphi 0, %s158
    %s173 = sphi 0, %s159
    %s177 = sphi 0, %s177
    %s179 = sphi 0, %s177
    %s180 = sphi 0, %s179
    %s194 = sphi 0, %s180
    %s198 = sphi 0, %s198
    %s200 = sphi 0, %s198
    %s201 = sphi 0, %s200
    %s215 = sphi 0, %s201
    %s219 = sphi 0, %s219
    %s221 = sphi 0, %s219
    %s222 = sphi 0, %s221
    %s236 = sphi 0, %s222
    %s240 = sphi 0, %s240
    %s242 = sphi 0, %s240
    %s243 = sphi 0, %s242
    %s257 = sphi 0, %s243
    %s263 = sphi 0, %s265
    %s266 = sphi 0, %s263
    %s267 = sphi 0, %s266
    %s283 = sphi 0, %s267
  $region4: #{triple_town_forward.1} parent=0 // loop_header_branch
    %20 = sbr.rel (%p18) target = $region8
  $region5: #{triple_town_forward.1} parent=0 // loop_body
    %s22 = ssub.s32 %s17, 1
    %s23 = ssub.s32 %s17, 2
    %s24 = sadd.s32 %s17, 1
    %s25 = ssub.s32 %s17, %s24
    %p26 = scmp.eq.s32.totalorder %s25, 0
    %s28 = sadd.s32 %s27, 1
    %s29 = scalar_select %p26, %s27, %s28
    %p32 = pneg %p26
    %p33 = scmp.eq.s32.totalorder %s17, 3
    %p34 = por %p32, %p33
    %p35 = scmp.ne.s32.totalorder %s27, %s30
    %p36 = scmp.eq.s32.totalorder %s17, 0
    %p37 = por %p35, %p36
    %p38 = scmp.ne.s32.totalorder %s27, %s30
    %p39 = scmp.eq.s32.totalorder %s22, 3
    %p40 = por %p38, %p39
    %p41 = scmp.ne.s32.totalorder %s30, %s31
    %p42 = scmp.eq.s32.totalorder %s22, 0
    %p43 = por %p41, %p42
    %p44 = scmp.ne.s32.totalorder %s30, %s31
    %p45 = scmp.eq.s32.totalorder %s23, 3
    %p46 = por %p44, %p45
    %p48 = scmp.ne.s32.totalorder %s31, %s47
    %p49 = scmp.eq.s32.totalorder %s23, 0
    %p50 = por %p48, %p49
    %s52 = sadd.s32 %s51, 1
    %p55 = scmp.eq.s32.totalorder %s17, 3
    %p56 = scmp.ne.s32.totalorder %s51, %s53
    %p57 = scmp.eq.s32.totalorder %s17, 0
    %p58 = por %p56, %p57
    %p59 = scmp.ne.s32.totalorder %s51, %s53
    %p60 = scmp.eq.s32.totalorder %s22, 3
    %p61 = por %p59, %p60
    %p62 = scmp.ne.s32.totalorder %s53, %s54
    %p63 = scmp.eq.s32.totalorder %s22, 0
    %p64 = por %p62, %p63
    %p65 = scmp.ne.s32.totalorder %s53, %s54
    %p66 = scmp.eq.s32.totalorder %s23, 3
    %p67 = por %p65, %p66
    %p69 = scmp.ne.s32.totalorder %s54, %s68
    %p70 = scmp.eq.s32.totalorder %s23, 0
    %p71 = por %p69, %p70
    %s73 = sadd.s32 %s72, 1
    %p76 = scmp.eq.s32.totalorder %s17, 3
    %p77 = scmp.ne.s32.totalorder %s72, %s74
    %p78 = scmp.eq.s32.totalorder %s17, 0
    %p79 = por %p77, %p78
    %p80 = scmp.ne.s32.totalorder %s72, %s74
    %p81 = scmp.eq.s32.totalorder %s22, 3
    %p82 = por %p80, %p81
    %p83 = scmp.ne.s32.totalorder %s74, %s75
    %p84 = scmp.eq.s32.totalorder %s22, 0
    %p85 = por %p83, %p84
    %p86 = scmp.ne.s32.totalorder %s74, %s75
    %p87 = scmp.eq.s32.totalorder %s23, 3
    %p88 = por %p86, %p87
    %p90 = scmp.ne.s32.totalorder %s75, %s89
    %p91 = scmp.eq.s32.totalorder %s23, 0
    %p92 = por %p90, %p91
    %s94 = sadd.s32 %s93, 1
    %p97 = scmp.eq.s32.totalorder %s17, 3
    %p98 = scmp.ne.s32.totalorder %s93, %s95
    %p99 = scmp.eq.s32.totalorder %s17, 0
    %p100 = por %p98, %p99
    %p101 = scmp.ne.s32.totalorder %s93, %s95
    %p102 = scmp.eq.s32.totalorder %s22, 3
    %p103 = por %p101, %p102
    %p104 = scmp.ne.s32.totalorder %s95, %s96
    %p105 = scmp.eq.s32.totalorder %s22, 0
    %p106 = por %p104, %p105
    %p107 = scmp.ne.s32.totalorder %s95, %s96
    %p108 = scmp.eq.s32.totalorder %s23, 3
    %p109 = por %p107, %p108
    %p111 = scmp.ne.s32.totalorder %s96, %s110
    %p112 = scmp.eq.s32.totalorder %s23, 0
    %p113 = por %p111, %p112
    %s115 = sadd.s32 %s114, 1
    %p118 = scmp.eq.s32.totalorder %s17, 3
    %p119 = scmp.ne.s32.totalorder %s114, %s116
    %p120 = scmp.eq.s32.totalorder %s17, 0
    %p121 = por %p119, %p120
    %p122 = scmp.ne.s32.totalorder %s114, %s116
    %p123 = scmp.eq.s32.totalorder %s22, 3
    %p124 = por %p122, %p123
    %p125 = scmp.ne.s32.totalorder %s116, %s117
    %p126 = scmp.eq.s32.totalorder %s22, 0
    %p127 = por %p125, %p126
    %p128 = scmp.ne.s32.totalorder %s116, %s117
    %p129 = scmp.eq.s32.totalorder %s23, 3
    %p130 = por %p128, %p129
    %p132 = scmp.ne.s32.totalorder %s117, %s131
    %p133 = scmp.eq.s32.totalorder %s23, 0
    %p134 = por %p132, %p133
    %s136 = sadd.s32 %s135, 1
    %p139 = scmp.eq.s32.totalorder %s17, 3
    %p140 = scmp.ne.s32.totalorder %s135, %s137
    %p141 = scmp.eq.s32.totalorder %s17, 0
    %p142 = por %p140, %p141
    %p143 = scmp.ne.s32.totalorder %s135, %s137
    %p144 = scmp.eq.s32.totalorder %s22, 3
    %p145 = por %p143, %p144
    %p146 = scmp.ne.s32.totalorder %s137, %s138
    %p147 = scmp.eq.s32.totalorder %s22, 0
    %p148 = por %p146, %p147
    %p149 = scmp.ne.s32.totalorder %s137, %s138
    %p150 = scmp.eq.s32.totalorder %s23, 3
    %p151 = por %p149, %p150
    %p153 = scmp.ne.s32.totalorder %s138, %s152
    %p154 = scmp.eq.s32.totalorder %s23, 0
    %p155 = por %p153, %p154
    %s157 = sadd.s32 %s156, 1
    %p160 = scmp.eq.s32.totalorder %s17, 3
    %p161 = scmp.ne.s32.totalorder %s156, %s158
    %p162 = scmp.eq.s32.totalorder %s17, 0
    %p163 = por %p161, %p162
    %p164 = scmp.ne.s32.totalorder %s156, %s158
    %p165 = scmp.eq.s32.totalorder %s22, 3
    %p166 = por %p164, %p165
    %p167 = scmp.ne.s32.totalorder %s158, %s159
    %p168 = scmp.eq.s32.totalorder %s22, 0
    %p169 = por %p167, %p168
    %p170 = scmp.ne.s32.totalorder %s158, %s159
    %p171 = scmp.eq.s32.totalorder %s23, 3
    %p172 = por %p170, %p171
    %p174 = scmp.ne.s32.totalorder %s159, %s173
    %p175 = scmp.eq.s32.totalorder %s23, 0
    %p176 = por %p174, %p175
    %s178 = sadd.s32 %s177, 1
    %p181 = scmp.eq.s32.totalorder %s17, 3
    %p182 = scmp.ne.s32.totalorder %s177, %s179
    %p183 = scmp.eq.s32.totalorder %s17, 0
    %p184 = por %p182, %p183
    %p185 = scmp.ne.s32.totalorder %s177, %s179
    %p186 = scmp.eq.s32.totalorder %s22, 3
    %p187 = por %p185, %p186
    %p188 = scmp.ne.s32.totalorder %s179, %s180
    %p189 = scmp.eq.s32.totalorder %s22, 0
    %p190 = por %p188, %p189
    %p191 = scmp.ne.s32.totalorder %s179, %s180
    %p192 = scmp.eq.s32.totalorder %s23, 3
    %p193 = por %p191, %p192
    %p195 = scmp.ne.s32.totalorder %s180, %s194
    %p196 = scmp.eq.s32.totalorder %s23, 0
    %p197 = por %p195, %p196
    %s199 = sadd.s32 %s198, 1
    %p202 = scmp.eq.s32.totalorder %s17, 3
    %p203 = scmp.ne.s32.totalorder %s198, %s200
    %p204 = scmp.eq.s32.totalorder %s17, 0
    %p205 = por %p203, %p204
    %p206 = scmp.ne.s32.totalorder %s198, %s200
    %p207 = scmp.eq.s32.totalorder %s22, 3
    %p208 = por %p206, %p207
    %p209 = scmp.ne.s32.totalorder %s200, %s201
    %p210 = scmp.eq.s32.totalorder %s22, 0
    %p211 = por %p209, %p210
    %p212 = scmp.ne.s32.totalorder %s200, %s201
    %p213 = scmp.eq.s32.totalorder %s23, 3
    %p214 = por %p212, %p213
    %p216 = scmp.ne.s32.totalorder %s201, %s215
    %p217 = scmp.eq.s32.totalorder %s23, 0
    %p218 = por %p216, %p217
    %s220 = sadd.s32 %s219, 1
    %p223 = scmp.eq.s32.totalorder %s17, 3
    %p224 = scmp.ne.s32.totalorder %s219, %s221
    %p225 = scmp.eq.s32.totalorder %s17, 0
    %p226 = por %p224, %p225
    %p227 = scmp.ne.s32.totalorder %s219, %s221
    %p228 = scmp.eq.s32.totalorder %s22, 3
    %p229 = por %p227, %p228
    %p230 = scmp.ne.s32.totalorder %s221, %s222
    %p231 = scmp.eq.s32.totalorder %s22, 0
    %p232 = por %p230, %p231
    %p233 = scmp.ne.s32.totalorder %s221, %s222
    %p234 = scmp.eq.s32.totalorder %s23, 3
    %p235 = por %p233, %p234
    %p237 = scmp.ne.s32.totalorder %s222, %s236
    %p238 = scmp.eq.s32.totalorder %s23, 0
    %p239 = por %p237, %p238
    %s241 = sadd.s32 %s240, 1
    %p244 = scmp.eq.s32.totalorder %s17, 3
    %p245 = scmp.ne.s32.totalorder %s240, %s242
    %p246 = scmp.eq.s32.totalorder %s17, 0
    %p247 = por %p245, %p246
    %p248 = scmp.ne.s32.totalorder %s240, %s242
    %p249 = scmp.eq.s32.totalorder %s22, 3
    %p250 = por %p248, %p249
    %p251 = scmp.ne.s32.totalorder %s242, %s243
    %p252 = scmp.eq.s32.totalorder %s22, 0
    %p253 = por %p251, %p252
    %p254 = scmp.ne.s32.totalorder %s242, %s243
    %p255 = scmp.eq.s32.totalorder %s23, 3
    %p256 = por %p254, %p255
    %p258 = scmp.ne.s32.totalorder %s243, %s257
    %p259 = scmp.eq.s32.totalorder %s23, 0
    %p260 = por %p258, %p259
    %s261 = ssub.s32 %s17, %s24
    %p262 = scmp.eq.s32.totalorder %s261, 0
    %s264 = sadd.s32 %s263, 1
    %s265 = scalar_select %p262, %s263, %s264
    %p268 = pneg %p262
    %p269 = scmp.eq.s32.totalorder %s17, 3
    %p270 = por %p268, %p269
    %p271 = scmp.ne.s32.totalorder %s263, %s266
    %p272 = scmp.eq.s32.totalorder %s17, 0
    %p273 = por %p271, %p272
    %p274 = scmp.ne.s32.totalorder %s263, %s266
    %p275 = scmp.eq.s32.totalorder %s22, 3
    %p276 = por %p274, %p275
    %p277 = scmp.ne.s32.totalorder %s266, %s267
    %p278 = scmp.eq.s32.totalorder %s22, 0
    %p279 = por %p277, %p278
    %p280 = scmp.ne.s32.totalorder %s266, %s267
    %p281 = scmp.eq.s32.totalorder %s23, 3
    %p282 = por %p280, %p281
    %p284 = scmp.ne.s32.totalorder %s267, %s283
    %p285 = scmp.eq.s32.totalorder %s23, 0
    %p286 = por %p284, %p285
    %p287 = scmp.le.s32.totalorder 1, %s17
    %p288 = scmp.lt.s32.totalorder %s17, 5
    %p289 = pnand %p287, %p288
    %p290 = pneg %p289
    // Predicated region
    $region9: #{triple_town_forward.1} parent=5 // pred_check
      _
    $region10: #{triple_town_forward.1} parent=5 // pred_check_branch
      %292 = sbr.rel (%p289) target = $region12
    $region11: #{triple_town_forward.1} parent=5 // pred_region
      %s293 = ssub.s32 %s17, 1
      // Predicated region
      $region13: #{triple_town_forward.1} parent=11 // pred_check
        %p294 = pneg %p64
      $region14: #{triple_town_forward.1} parent=11 // pred_check_branch
        %296 = sbr.rel (%p294) target = $region16
      $region15: #{triple_town_forward.1} parent=11 // pred_region
        _
      $region16: #{triple_town_forward.1} parent=11 // pred_fallthru
        _
      // Predicated region
      $region17: #{triple_town_forward.1} parent=11 // pred_check
        %p297 = pneg %p85
      $region18: #{triple_town_forward.1} parent=11 // pred_check_branch
        %299 = sbr.rel (%p297) target = $region20
      $region19: #{triple_town_forward.1} parent=11 // pred_region
        _
      $region20: #{triple_town_forward.1} parent=11 // pred_fallthru
        _
      // Predicated region
      $region21: #{triple_town_forward.1} parent=11 // pred_check
        %p300 = pneg %p106
      $region22: #{triple_town_forward.1} parent=11 // pred_check_branch
        %302 = sbr.rel (%p300) target = $region24
      $region23: #{triple_town_forward.1} parent=11 // pred_region
        _
      $region24: #{triple_town_forward.1} parent=11 // pred_fallthru
        _
      // Predicated region
      $region25: #{triple_town_forward.1} parent=11 // pred_check
        %p303 = pneg %p127
      $region26: #{triple_town_forward.1} parent=11 // pred_check_branch
        %305 = sbr.rel (%p303) target = $region28
      $region27: #{triple_town_forward.1} parent=11 // pred_region
        _
      $region28: #{triple_town_forward.1} parent=11 // pred_fallthru
        _
      // Predicated region
      $region29: #{triple_town_forward.1} parent=11 // pred_check
        %p306 = pneg %p148
      $region30: #{triple_town_forward.1} parent=11 // pred_check_branch
        %308 = sbr.rel (%p306) target = $region32
      $region31: #{triple_town_forward.1} parent=11 // pred_region
        _
      $region32: #{triple_town_forward.1} parent=11 // pred_fallthru
        _
      // Predicated region
      $region33: #{triple_town_forward.1} parent=11 // pred_check
        %p309 = pneg %p169
      $region34: #{triple_town_forward.1} parent=11 // pred_check_branch
        %311 = sbr.rel (%p309) target = $region36
      $region35: #{triple_town_forward.1} parent=11 // pred_region
        _
      $region36: #{triple_town_forward.1} parent=11 // pred_fallthru
        _
      // Predicated region
      $region37: #{triple_town_forward.1} parent=11 // pred_check
        %p312 = pneg %p190
      $region38: #{triple_town_forward.1} parent=11 // pred_check_branch
        %314 = sbr.rel (%p312) target = $region40
      $region39: #{triple_town_forward.1} parent=11 // pred_region
        _
      $region40: #{triple_town_forward.1} parent=11 // pred_fallthru
        _
      // Predicated region
      $region41: #{triple_town_forward.1} parent=11 // pred_check
        %p315 = pneg %p211
      $region42: #{triple_town_forward.1} parent=11 // pred_check_branch
        %317 = sbr.rel (%p315) target = $region44
      $region43: #{triple_town_forward.1} parent=11 // pred_region
        _
      $region44: #{triple_town_forward.1} parent=11 // pred_fallthru
        _
      // Predicated region
      $region45: #{triple_town_forward.1} parent=11 // pred_check
        %p318 = pneg %p232
      $region46: #{triple_town_forward.1} parent=11 // pred_check_branch
        %320 = sbr.rel (%p318) target = $region48
      $region47: #{triple_town_forward.1} parent=11 // pred_region
        _
      $region48: #{triple_town_forward.1} parent=11 // pred_fallthru
        _
      // Predicated region
      $region49: #{triple_town_forward.1} parent=11 // pred_check
        %p321 = pneg %p253
      $region50: #{triple_town_forward.1} parent=11 // pred_check_branch
        %323 = sbr.rel (%p321) target = $region52
      $region51: #{triple_town_forward.1} parent=11 // pred_region
        _
      $region52: #{triple_town_forward.1} parent=11 // pred_fallthru
        _
    $region12: #{triple_town_forward.1} parent=5 // pred_fallthru
      _
    %p324 = scmp.lt.s32.totalorder %s17, 4
    // Predicated region
    $region53: #{triple_town_forward.1} parent=5 // pred_check
      %p325 = pneg %p324
    $region54: #{triple_town_forward.1} parent=5 // pred_check_branch
      %327 = sbr.rel (%p325) target = $region56
    $region55: #{triple_town_forward.1} parent=5 // pred_region
      // Predicated region
      $region57: #{triple_town_forward.1} parent=55 // pred_check
        %p328 = pneg %p37
      $region58: #{triple_town_forward.1} parent=55 // pred_check_branch
        %330 = sbr.rel (%p328) target = $region60
      $region59: #{triple_town_forward.1} parent=55 // pred_region
        %s331 = smul.u32 2, %s17
        %p332 = scmp.lt.s32.totalorder %s331, 7
        %s333 = scalar_select %p332, %s331, 7
        %s334 = smul.addr %s333, 3
        %s335 = smul.addr %s334, 4
        %s336 = scalar_lea.vmem %s0, %s335
        %s337 = smul.u32 2, %s17
      $region60: #{triple_town_forward.1} parent=55 // pred_fallthru
        _
    $region56: #{triple_town_forward.1} parent=5 // pred_fallthru
      _
    %p338 = scmp.le.s32.totalorder 1, %s17
    %p339 = scmp.lt.s32.totalorder %s17, 5
    %p340 = pnand %p338, %p339
    %p341 = pneg %p340
    // Predicated region
    $region61: #{triple_town_forward.1} parent=5 // pred_check
      _
    $region62: #{triple_town_forward.1} parent=5 // pred_check_branch
      %343 = sbr.rel (%p340) target = $region64
    $region63: #{triple_town_forward.1} parent=5 // pred_region
      %s344 = ssub.s32 %s17, 1
      %s345 = smul.u32 2, %s22
      %p346 = scmp.lt.s32.totalorder %s345, 7
      %s347 = scalar_select %p346, %s345, 7
      %s348 = smul.addr %s347, 3
      %s349 = smul.addr %s348, 4
      %s350 = scalar_lea.vmem %s0, %s349
      %p351 = pneg %p43
      %p352 = pneg %p40
      %p353 = pneg %p64
      %p354 = pneg %p61
      %p355 = pneg %p85
      %p356 = pneg %p82
      %p357 = pneg %p106
      %p358 = pneg %p103
      %p359 = pneg %p127
      %p360 = pneg %p124
      %p361 = pneg %p148
      %p362 = pneg %p145
      %p363 = pneg %p169
      %p364 = pneg %p166
      %p365 = pneg %p190
      %p366 = pneg %p187
      %p367 = pneg %p211
      %p368 = pneg %p208
      %p369 = pneg %p232
      %p370 = pneg %p229
      %p371 = pneg %p253
      %p372 = pneg %p250
      %p373 = pneg %p279
      %p374 = pneg %p276
      %s375 = smul.u32 2, %s22
      %p376 = scmp.lt.s32.totalorder %s375, 7
      %s377 = scalar_select %p376, %s375, 7
      %s378 = smul.addr %s377, 8
      %s379 = scalar_lea.vmem %s11, %s378
      %s380 = smul.u32 2, %s22
      %p381 = scmp.lt.s32.totalorder %s380, 7
      %s382 = scalar_select %p381, %s380, 7
      %s383 = smul.addr %s382, 3
      %s384 = smul.addr %s383, 4
      %s385 = scalar_lea.vmem %s0, %s384
      %s386 = smul.u32 2, %s22
      %s387 = smul.u32 2, %s22
      %p388 = scmp.lt.s32.totalorder %s387, 7
      %s389 = scalar_select %p388, %s387, 7
      %s390 = smul.addr %s389, 8
      %s391 = scalar_lea.vmem %s11, %s390
      %s392 = smul.u32 2, %s22
      %v394 = vld [vmem:[%s385] sm:$0xff]
      %v395 = vld [vmem:[%s385 + $0x8] sm:$0xf]
      %v396 = vld [vmem:[%s385 + $0xc] sm:$0xff]
      %v397 = vld [vmem:[%s385 + $0x14] sm:$0xf]
      %v398 = vld [vmem:[%s1] sm:$0xff]
      %v399 = vld [vmem:[%s1 + $0x8] sm:$0xff]
      %v400 = vld [vmem:[%s1 + $0x10] sm:$0xff]
      %v401 = vld [vmem:[%s1 + $0x18] sm:$0xff]
      %v402 = vld [vmem:[%s1 + $0x20] sm:$0xff]
      %v403 = vld [vmem:[%s1 + $0x28] sm:$0xff]
      %v404 = vld [vmem:[%s1 + $0x30] sm:$0xff]
      %v405 = vld [vmem:[%s1 + $0x38] sm:$0xff]
      %v406 = vld [vmem:[%s1 + $0x40] sm:$0xff]
      %v407 = vld [vmem:[%s1 + $0x48] sm:$0xff]
      %v408 = vld [vmem:[%s1 + $0x50] sm:$0xff]
      %v409 = vld [vmem:[%s1 + $0x58] sm:$0xff]
      %v410 = vld [vmem:[%s1 + $0x60] sm:$0xff]
      %v411 = vld [vmem:[%s1 + $0x68] sm:$0xff]
      %v412 = vld [vmem:[%s1 + $0x70] sm:$0xff]
      %v413 = vld [vmem:[%s1 + $0x78] sm:$0xff]
      %v414 = vld [vmem:[%s1 + $0x80] sm:$0xff]
      %v415 = vld [vmem:[%s1 + $0x88] sm:$0xff]
      %v416 = vld [vmem:[%s1 + $0x90] sm:$0xff]
      %v417 = vld [vmem:[%s1 + $0x98] sm:$0xff]
      %v418 = vld [vmem:[%s1 + $0xa0] sm:$0xff]
      %v419 = vld [vmem:[%s1 + $0xa8] sm:$0xff]
      %v420 = vld [vmem:[%s1 + $0xb0] sm:$0xff]
      %v421 = vld [vmem:[%s1 + $0xb8] sm:$0xff]
      %v422 = vld [vmem:[%s1 + $0xc0] sm:$0xff]
      %v423 = vld [vmem:[%s1 + $0xc8] sm:$0xff]
      %v424 = vld [vmem:[%s1 + $0xd0] sm:$0xff]
      %v425 = vld [vmem:[%s1 + $0xd8] sm:$0xff]
      %v426 = vld [vmem:[%s1 + $0xe0] sm:$0xff]
      %v427 = vld [vmem:[%s1 + $0xe8] sm:$0xff]
      %v428 = vld [vmem:[%s1 + $0xf0] sm:$0xff]
      %v429 = vld [vmem:[%s1 + $0xf8] sm:$0xff]
      %v430 = vld [vmem:[%s1 + $0x100] sm:$0xff]
      %v431 = vld [vmem:[%s1 + $0x108] sm:$0xff]
      %v432 = vld [vmem:[%s1 + $0x110] sm:$0xff]
      %v433 = vld [vmem:[%s1 + $0x118] sm:$0xff]
      %v434 = vld [vmem:[%s1 + $0x120] sm:$0xff]
      %v435 = vld [vmem:[%s1 + $0x128] sm:$0xff]
      %v436 = vld [vmem:[%s1 + $0x130] sm:$0xff]
      %v437 = vld [vmem:[%s1 + $0x138] sm:$0xff]
      %v438 = vld [vmem:[%s1 + $0x140] sm:$0xff]
      %v439 = vld [vmem:[%s1 + $0x148] sm:$0xff]
      %v440 = vld [vmem:[%s1 + $0x150] sm:$0xff]
      %v441 = vld [vmem:[%s1 + $0x158] sm:$0xff]
      %v442 = vld [vmem:[%s1 + $0x160] sm:$0xff]
      %v443 = vld [vmem:[%s1 + $0x168] sm:$0xff]
      %v444 = vld [vmem:[%s1 + $0x170] sm:$0xff]
      %v445 = vld [vmem:[%s1 + $0x178] sm:$0xff]
      %v446 = vld [vmem:[%s2] sm:$0x3]
      %v448 = vlaneseq
      %v449 = vshrl.u32 %v448, 7
      %v450 = vsub.s32 0, %v449
      %v451 = vrot.slane %v446, %v450
      %v452 = vlaneseq
      %v453 = vshrl.u32 %v452, 7
      %v454 = vsub.s32 1, %v453
      %v455 = vrot.slane %v446, %v454
      %v462 = vunpack.c.l.b16 %v394
      %v463 = vunpack.c.h.b16 %v394
      %v464 = vunpack.c.l.b16 %v395
      %v465 = vunpack.c.l.b16 %v396
      %v466 = vunpack.c.h.b16 %v396
      %v467 = vunpack.c.l.b16 %v397
      %v468 = vpack.c.b16 %v465, %v462
      %v469 = vpack.c.b16 %v466, %v463
      %v470 = vpack.c.b16 %v467, %v464
      %v522 = vunpack.c.l.b16 %v398
      %v523 = vunpack.c.h.b16 %v398
      %v524 = vunpack.c.l.b16 %v399
      %v525 = vunpack.c.h.b16 %v399
      %v526 = vunpack.c.l.b16 %v400
      %v527 = vunpack.c.h.b16 %v400
      %v528 = vunpack.c.l.b16 %v401
      %v529 = vunpack.c.h.b16 %v401
      %v530 = vunpack.c.l.b16 %v402
      %v531 = vunpack.c.h.b16 %v402
      %v532 = vunpack.c.l.b16 %v403
      %v533 = vunpack.c.h.b16 %v403
      %v534 = vunpack.c.l.b16 %v404
      %v535 = vunpack.c.h.b16 %v404
      %v536 = vunpack.c.l.b16 %v405
      %v537 = vunpack.c.h.b16 %v405
      %v538 = vunpack.c.l.b16 %v406
      %v539 = vunpack.c.h.b16 %v406
      %v540 = vunpack.c.l.b16 %v407
      %v541 = vunpack.c.h.b16 %v407
      %v542 = vunpack.c.l.b16 %v408
      %v543 = vunpack.c.h.b16 %v408
      %v544 = vunpack.c.l.b16 %v409
      %v545 = vunpack.c.h.b16 %v409
      %v546 = vunpack.c.l.b16 %v410
      %v547 = vunpack.c.h.b16 %v410
      %v548 = vunpack.c.l.b16 %v411
      %v549 = vunpack.c.h.b16 %v411
      %v550 = vunpack.c.l.b16 %v412
      %v551 = vunpack.c.h.b16 %v412
      %v552 = vunpack.c.l.b16 %v413
      %v553 = vunpack.c.h.b16 %v413
      %v554 = vunpack.c.l.b16 %v414
      %v555 = vunpack.c.h.b16 %v414
      %v556 = vunpack.c.l.b16 %v415
      %v557 = vunpack.c.h.b16 %v415
      %v558 = vunpack.c.l.b16 %v416
      %v559 = vunpack.c.h.b16 %v416
      %v560 = vunpack.c.l.b16 %v417
      %v561 = vunpack.c.h.b16 %v417
      %v562 = vunpack.c.l.b16 %v418
      %v563 = vunpack.c.h.b16 %v418
      %v564 = vunpack.c.l.b16 %v419
      %v565 = vunpack.c.h.b16 %v419
      %v566 = vunpack.c.l.b16 %v420
      %v567 = vunpack.c.h.b16 %v420
      %v568 = vunpack.c.l.b16 %v421
      %v569 = vunpack.c.h.b16 %v421
      %v570 = vunpack.c.l.b16 %v422
      %v571 = vunpack.c.h.b16 %v422
      %v572 = vunpack.c.l.b16 %v423
      %v573 = vunpack.c.h.b16 %v423
      %v574 = vunpack.c.l.b16 %v424
      %v575 = vunpack.c.h.b16 %v424
      %v576 = vunpack.c.l.b16 %v425
      %v577 = vunpack.c.h.b16 %v425
      %v578 = vunpack.c.l.b16 %v426
      %v579 = vunpack.c.h.b16 %v426
      %v580 = vunpack.c.l.b16 %v427
      %v581 = vunpack.c.h.b16 %v427
      %v582 = vunpack.c.l.b16 %v428
      %v583 = vunpack.c.h.b16 %v428
      %v584 = vunpack.c.l.b16 %v429
      %v585 = vunpack.c.h.b16 %v429
      %v586 = vunpack.c.l.b16 %v430
      %v587 = vunpack.c.h.b16 %v430
      %v588 = vunpack.c.l.b16 %v431
      %v589 = vunpack.c.h.b16 %v431
      %v590 = vunpack.c.l.b16 %v432
      %v591 = vunpack.c.h.b16 %v432
      %v592 = vunpack.c.l.b16 %v433
      %v593 = vunpack.c.h.b16 %v433
      %v594 = vunpack.c.l.b16 %v434
      %v595 = vunpack.c.h.b16 %v434
      %v596 = vunpack.c.l.b16 %v435
      %v597 = vunpack.c.h.b16 %v435
      %v598 = vunpack.c.l.b16 %v436
      %v599 = vunpack.c.h.b16 %v436
      %v600 = vunpack.c.l.b16 %v437
      %v601 = vunpack.c.h.b16 %v437
      %v602 = vunpack.c.l.b16 %v438
      %v603 = vunpack.c.h.b16 %v438
      %v604 = vunpack.c.l.b16 %v439
      %v605 = vunpack.c.h.b16 %v439
      %v606 = vunpack.c.l.b16 %v440
      %v607 = vunpack.c.h.b16 %v440
      %v608 = vunpack.c.l.b16 %v441
      %v609 = vunpack.c.h.b16 %v441
      %v610 = vunpack.c.l.b16 %v442
      %v611 = vunpack.c.h.b16 %v442
      %v612 = vunpack.c.l.b16 %v443
      %v613 = vunpack.c.h.b16 %v443
      %v614 = vunpack.c.l.b16 %v444
      %v615 = vunpack.c.h.b16 %v444
      %v616 = vunpack.c.l.b16 %v445
      %v617 = vunpack.c.h.b16 %v445
      %v618 = vpack.c.b16 %v524, %v522
      %v619 = vpack.c.b16 %v525, %v523
      %v620 = vpack.c.b16 %v528, %v526
      %v621 = vpack.c.b16 %v529, %v527
      %v622 = vpack.c.b16 %v532, %v530
      %v623 = vpack.c.b16 %v533, %v531
      %v624 = vpack.c.b16 %v536, %v534
      %v625 = vpack.c.b16 %v537, %v535
      %v626 = vpack.c.b16 %v540, %v538
      %v627 = vpack.c.b16 %v541, %v539
      %v628 = vpack.c.b16 %v544, %v542
      %v629 = vpack.c.b16 %v545, %v543
      %v630 = vpack.c.b16 %v548, %v546
      %v631 = vpack.c.b16 %v549, %v547
      %v632 = vpack.c.b16 %v552, %v550
      %v633 = vpack.c.b16 %v553, %v551
      %v634 = vpack.c.b16 %v556, %v554
      %v635 = vpack.c.b16 %v557, %v555
      %v636 = vpack.c.b16 %v560, %v558
      %v637 = vpack.c.b16 %v561, %v559
      %v638 = vpack.c.b16 %v564, %v562
      %v639 = vpack.c.b16 %v565, %v563
      %v640 = vpack.c.b16 %v568, %v566
      %v641 = vpack.c.b16 %v569, %v567
      %v642 = vpack.c.b16 %v572, %v570
      %v643 = vpack.c.b16 %v573, %v571
      %v644 = vpack.c.b16 %v576, %v574
      %v645 = vpack.c.b16 %v577, %v575
      %v646 = vpack.c.b16 %v580, %v578
      %v647 = vpack.c.b16 %v581, %v579
      %v648 = vpack.c.b16 %v584, %v582
      %v649 = vpack.c.b16 %v585, %v583
      %v650 = vpack.c.b16 %v588, %v586
      %v651 = vpack.c.b16 %v589, %v587
      %v652 = vpack.c.b16 %v592, %v590
      %v653 = vpack.c.b16 %v593, %v591
      %v654 = vpack.c.b16 %v596, %v594
      %v655 = vpack.c.b16 %v597, %v595
      %v656 = vpack.c.b16 %v600, %v598
      %v657 = vpack.c.b16 %v601, %v599
      %v658 = vpack.c.b16 %v604, %v602
      %v659 = vpack.c.b16 %v605, %v603
      %v660 = vpack.c.b16 %v608, %v606
      %v661 = vpack.c.b16 %v609, %v607
      %v662 = vpack.c.b16 %v612, %v610
      %v663 = vpack.c.b16 %v613, %v611
      %v664 = vpack.c.b16 %v616, %v614
      %v665 = vpack.c.b16 %v617, %v615
      %714 = vmatprep.subr.bf16.mxu0 %v619
      %715 = vmatpush1.bf16.msra.mxu0 %v618
      %716 = vmatprep.subr.bf16.mxu0 %v621
      %717 = vmatpush1.bf16.msra.mxu0 %v620
      %718 = vmatprep.subr.bf16.mxu0 %v623
      %719 = vmatpush1.bf16.msra.mxu0 %v622
      %720 = vmatprep.subr.bf16.mxu0 %v625
      %721 = vmatpush1.bf16.msra.mxu0 %v624
      %722 = vmatprep.subr.bf16.mxu0 %v627
      %723 = vmatpush1.bf16.msra.mxu0 %v626
      %724 = vmatprep.subr.bf16.mxu0 %v629
      %725 = vmatpush1.bf16.msra.mxu0 %v628
      %726 = vmatprep.subr.bf16.mxu0 %v631
      %727 = vmatpush1.bf16.msra.mxu0 %v630
      %728 = vmatprep.subr.bf16.mxu0 %v633
      %729 = vmatpush1.bf16.msra.mxu0 %v632
      %730 = vmatprep.subr.bf16.mxu0 %v635
      %731 = vmatpush1.bf16.msra.mxu0 %v634
      %732 = vmatprep.subr.bf16.mxu0 %v637
      %733 = vmatpush1.bf16.msra.mxu0 %v636
      %734 = vmatprep.subr.bf16.mxu0 %v639
      %735 = vmatpush1.bf16.msra.mxu0 %v638
      %736 = vmatprep.subr.bf16.mxu0 %v641
      %737 = vmatpush1.bf16.msra.mxu0 %v640
      %738 = vmatprep.subr.bf16.mxu0 %v643
      %739 = vmatpush1.bf16.msra.mxu0 %v642
      %740 = vmatprep.subr.bf16.mxu0 %v645
      %741 = vmatpush1.bf16.msra.mxu0 %v644
      %742 = vmatprep.subr.bf16.mxu0 %v647
      %743 = vmatpush1.bf16.msra.mxu0 %v646
      %744 = vmatprep.subr.bf16.mxu0 %v649
      %745 = vmatpush1.bf16.msra.mxu0 %v648
      %746 = vmatprep.mubr.bf16.mxu0 %v469
      %747 = vmatmul.mubr.bf16.gmra.mrb[0].mxu0 %v468
      %v748 = vpop.f32.mrb[0].mxu0
      %v749 = vadd.f32 %v451, %v748
      %v750 = vpop.f32.mrb[0].mxu0
      %v751 = vadd.f32 %v455, %v750
      %v752 = vpop.f32.mrb[0].mxu0
      %v753 = vadd.f32 %v451, %v752
      %v754 = vpop.f32.mrb[0].mxu0
      %v755 = vadd.f32 %v455, %v754
      %756 = vdwg.mxu0
      %757 = vmatprep.subr.bf16.mxu0 %v651
      %758 = vmatpush1.bf16.msra.mxu0 %v650
      %759 = vmatprep.subr.bf16.mxu0 %v653
      %760 = vmatpush1.bf16.msra.mxu0 %v652
      %761 = vmatprep.subr.bf16.mxu0 %v655
      %762 = vmatpush1.bf16.msra.mxu0 %v654
      %763 = vmatprep.subr.bf16.mxu0 %v657
      %764 = vmatpush1.bf16.msra.mxu0 %v656
      %765 = vmatprep.subr.bf16.mxu0 %v659
      %766 = vmatpush1.bf16.msra.mxu0 %v658
      %767 = vmatprep.subr.bf16.mxu0 %v661
      %768 = vmatpush1.bf16.msra.mxu0 %v660
      %769 = vmatprep.subr.bf16.mxu0 %v663
      %770 = vmatpush1.bf16.msra.mxu0 %v662
      %771 = vmatprep.subr.bf16.mxu0 %v665
      %772 = vmatpush1.bf16.msra.mxu0 %v664
      %773 = vmatprep.subr.bf16.mxu0 0
      %774 = vmatpush1.bf16.msra.mxu0 0
      %775 = vmatprep.subr.bf16.mxu0 0
      %776 = vmatpush1.bf16.msra.mxu0 0
      %777 = vmatprep.subr.bf16.mxu0 0
      %778 = vmatpush1.bf16.msra.mxu0 0
      %779 = vmatprep.subr.bf16.mxu0 0
      %780 = vmatpush1.bf16.msra.mxu0 0
      %781 = vmatprep.subr.bf16.mxu0 0
      %782 = vmatpush1.bf16.msra.mxu0 0
      %783 = vmatprep.subr.bf16.mxu0 0
      %784 = vmatpush1.bf16.msra.mxu0 0
      %785 = vmatprep.subr.bf16.mxu0 0
      %786 = vmatpush1.bf16.msra.mxu0 0
      %787 = vmatprep.subr.bf16.mxu0 0
      %788 = vmatpush1.bf16.msra.mxu0 0
      %789 = vmatprep.mubr.bf16.mxu0 0
      %790 = vmatmul.mubr.bf16.gmra.mrb[0].mxu0 %v470
      %v791 = vpop.f32.mrb[0].mxu0
      %v792 = vadd.f32 %v749, %v791
      %v793 = vpop.f32.mrb[0].mxu0
      %v794 = vadd.f32 %v751, %v793
      %v795 = vpop.f32.mrb[0].mxu0
      %v796 = vadd.f32 %v753, %v795
      %v797 = vpop.f32.mrb[0].mxu0
      %v798 = vadd.f32 %v755, %v797
      %799 = vdwg.mxu0
      %v800 = vmax.f32 %v792, 0.0
      %v801 = vmax.f32 %v794, 0.0
      %v802 = vmax.f32 %v796, 0.0
      %v803 = vmax.f32 %v798, 0.0
      %v804 = vpack.c.bf16 %v802, %v800
      %v805 = vpack.c.bf16 %v803, %v801
      %v806 = vld [vmem:[%s3] sm:$0xff]
      %v807 = vld [vmem:[%s3 + $0x8] sm:$0xff]
      %v808 = vld [vmem:[%s3 + $0x10] sm:$0xff]
      %v809 = vld [vmem:[%s3 + $0x18] sm:$0xff]
      %v810 = vld [vmem:[%s3 + $0x20] sm:$0xff]
      %v811 = vld [vmem:[%s3 + $0x28] sm:$0xff]
      %v812 = vld [vmem:[%s3 + $0x30] sm:$0xff]
      %v813 = vld [vmem:[%s3 + $0x38] sm:$0xff]
      %v814 = vld [vmem:[%s3 + $0x40] sm:$0xff]
      %v815 = vld [vmem:[%s3 + $0x48] sm:$0xff]
      %v816 = vld [vmem:[%s3 + $0x50] sm:$0xff]
      %v817 = vld [vmem:[%s3 + $0x58] sm:$0xff]
      %v818 = vld [vmem:[%s3 + $0x60] sm:$0xff]
      %v819 = vld [vmem:[%s3 + $0x68] sm:$0xff]
      %v820 = vld [vmem:[%s3 + $0x70] sm:$0xff]
      %v821 = vld [vmem:[%s3 + $0x78] sm:$0xff]
      %v822 = vld [vmem:[%s3 + $0x80] sm:$0xff]
      %v823 = vld [vmem:[%s3 + $0x88] sm:$0xff]
      %v824 = vld [vmem:[%s3 + $0x90] sm:$0xff]
      %v825 = vld [vmem:[%s3 + $0x98] sm:$0xff]
      %v826 = vld [vmem:[%s3 + $0xa0] sm:$0xff]
      %v827 = vld [vmem:[%s3 + $0xa8] sm:$0xff]
      %v828 = vld [vmem:[%s3 + $0xb0] sm:$0xff]
      %v829 = vld [vmem:[%s3 + $0xb8] sm:$0xff]
      %v830 = vld [vmem:[%s3 + $0xc0] sm:$0xff]
      %v831 = vld [vmem:[%s3 + $0xc8] sm:$0xff]
      %v832 = vld [vmem:[%s3 + $0xd0] sm:$0xff]
      %v833 = vld [vmem:[%s3 + $0xd8] sm:$0xff]
      %v834 = vld [vmem:[%s3 + $0xe0] sm:$0xff]
      %v835 = vld [vmem:[%s3 + $0xe8] sm:$0xff]
      %v836 = vld [vmem:[%s3 + $0xf0] sm:$0xff]
      %v837 = vld [vmem:[%s3 + $0xf8] sm:$0xff]
      %v838 = vld [vmem:[%s3 + $0x100] sm:$0xff]
      %v839 = vld [vmem:[%s3 + $0x108] sm:$0xff]
      %v840 = vld [vmem:[%s3 + $0x110] sm:$0xff]
      %v841 = vld [vmem:[%s3 + $0x118] sm:$0xff]
      %v842 = vld [vmem:[%s3 + $0x120] sm:$0xff]
      %v843 = vld [vmem:[%s3 + $0x128] sm:$0xff]
      %v844 = vld [vmem:[%s3 + $0x130] sm:$0xff]
      %v845 = vld [vmem:[%s3 + $0x138] sm:$0xff]
      %v846 = vld [vmem:[%s3 + $0x140] sm:$0xff]
      %v847 = vld [vmem:[%s3 + $0x148] sm:$0xff]
      %v848 = vld [vmem:[%s3 + $0x150] sm:$0xff]
      %v849 = vld [vmem:[%s3 + $0x158] sm:$0xff]
      %v850 = vld [vmem:[%s3 + $0x160] sm:$0xff]
      %v851 = vld [vmem:[%s3 + $0x168] sm:$0xff]
      %v852 = vld [vmem:[%s3 + $0x170] sm:$0xff]
      %v853 = vld [vmem:[%s3 + $0x178] sm:$0xff]
      %v854 = vld [vmem:[%s3 + $0x180] sm:$0xff]
      %v855 = vld [vmem:[%s3 + $0x188] sm:$0xff]
      %v856 = vld [vmem:[%s3 + $0x190] sm:$0xff]
      %v857 = vld [vmem:[%s3 + $0x198] sm:$0xff]
      %v858 = vld [vmem:[%s3 + $0x1a0] sm:$0xff]
      %v859 = vld [vmem:[%s3 + $0x1a8] sm:$0xff]
      %v860 = vld [vmem:[%s3 + $0x1b0] sm:$0xff]
      %v861 = vld [vmem:[%s3 + $0x1b8] sm:$0xff]
      %v862 = vld [vmem:[%s3 + $0x1c0] sm:$0xff]
      %v863 = vld [vmem:[%s3 + $0x1c8] sm:$0xff]
      %v864 = vld [vmem:[%s3 + $0x1d0] sm:$0xff]
      %v865 = vld [vmem:[%s3 + $0x1d8] sm:$0xff]
      %v866 = vld [vmem:[%s3 + $0x1e0] sm:$0xff]
      %v867 = vld [vmem:[%s3 + $0x1e8] sm:$0xff]
      %v868 = vld [vmem:[%s3 + $0x1f0] sm:$0xff]
      %v869 = vld [vmem:[%s3 + $0x1f8] sm:$0xff]
      %v870 = vld [vmem:[%s4] sm:$0xf]
      %v872 = vlaneseq
      %v873 = vshrl.u32 %v872, 7
      %v874 = vsub.s32 0, %v873
      %v875 = vrot.slane %v870, %v874
      %v876 = vlaneseq
      %v877 = vshrl.u32 %v876, 7
      %v878 = vsub.s32 1, %v877
      %v879 = vrot.slane %v870, %v878
      %v880 = vlaneseq
      %v881 = vshrl.u32 %v880, 7
      %v882 = vsub.s32 2, %v881
      %v883 = vrot.slane %v870, %v882
      %v884 = vlaneseq
      %v885 = vshrl.u32 %v884, 7
      %v886 = vsub.s32 3, %v885
      %v887 = vrot.slane %v870, %v886
      %v956 = vunpack.c.l.b16 %v806
      %v957 = vunpack.c.h.b16 %v806
      %v958 = vunpack.c.l.b16 %v807
      %v959 = vunpack.c.h.b16 %v807
      %v960 = vunpack.c.l.b16 %v808
      %v961 = vunpack.c.h.b16 %v808
      %v962 = vunpack.c.l.b16 %v809
      %v963 = vunpack.c.h.b16 %v809
      %v964 = vunpack.c.l.b16 %v810
      %v965 = vunpack.c.h.b16 %v810
      %v966 = vunpack.c.l.b16 %v811
      %v967 = vunpack.c.h.b16 %v811
      %v968 = vunpack.c.l.b16 %v812
      %v969 = vunpack.c.h.b16 %v812
      %v970 = vunpack.c.l.b16 %v813
      %v971 = vunpack.c.h.b16 %v813
      %v972 = vunpack.c.l.b16 %v814
      %v973 = vunpack.c.h.b16 %v814
      %v974 = vunpack.c.l.b16 %v815
      %v975 = vunpack.c.h.b16 %v815
      %v976 = vunpack.c.l.b16 %v816
      %v977 = vunpack.c.h.b16 %v816
      %v978 = vunpack.c.l.b16 %v817
      %v979 = vunpack.c.h.b16 %v817
      %v980 = vunpack.c.l.b16 %v818
      %v981 = vunpack.c.h.b16 %v818
      %v982 = vunpack.c.l.b16 %v819
      %v983 = vunpack.c.h.b16 %v819
      %v984 = vunpack.c.l.b16 %v820
      %v985 = vunpack.c.h.b16 %v820
      %v986 = vunpack.c.l.b16 %v821
      %v987 = vunpack.c.h.b16 %v821
      %v988 = vunpack.c.l.b16 %v822
      %v989 = vunpack.c.h.b16 %v822
      %v990 = vunpack.c.l.b16 %v823
      %v991 = vunpack.c.h.b16 %v823
      %v992 = vunpack.c.l.b16 %v824
      %v993 = vunpack.c.h.b16 %v824
      %v994 = vunpack.c.l.b16 %v825
      %v995 = vunpack.c.h.b16 %v825
      %v996 = vunpack.c.l.b16 %v826
      %v997 = vunpack.c.h.b16 %v826
      %v998 = vunpack.c.l.b16 %v827
      %v999 = vunpack.c.h.b16 %v827
      %v1000 = vunpack.c.l.b16 %v828
      %v1001 = vunpack.c.h.b16 %v828
      %v1002 = vunpack.c.l.b16 %v829
      %v1003 = vunpack.c.h.b16 %v829
      %v1004 = vunpack.c.l.b16 %v830
      %v1005 = vunpack.c.h.b16 %v830
      %v1006 = vunpack.c.l.b16 %v831
      %v1007 = vunpack.c.h.b16 %v831
      %v1008 = vunpack.c.l.b16 %v832
      %v1009 = vunpack.c.h.b16 %v832
      %v1010 = vunpack.c.l.b16 %v833
      %v1011 = vunpack.c.h.b16 %v833
      %v1012 = vunpack.c.l.b16 %v834
      %v1013 = vunpack.c.h.b16 %v834
      %v1014 = vunpack.c.l.b16 %v835
      %v1015 = vunpack.c.h.b16 %v835
      %v1016 = vunpack.c.l.b16 %v836
      %v1017 = vunpack.c.h.b16 %v836
      %v1018 = vunpack.c.l.b16 %v837
      %v1019 = vunpack.c.h.b16 %v837
      %v1020 = vunpack.c.l.b16 %v838
      %v1021 = vunpack.c.h.b16 %v838
      %v1022 = vunpack.c.l.b16 %v839
      %v1023 = vunpack.c.h.b16 %v839
      %v1024 = vunpack.c.l.b16 %v840
      %v1025 = vunpack.c.h.b16 %v840
      %v1026 = vunpack.c.l.b16 %v841
      %v1027 = vunpack.c.h.b16 %v841
      %v1028 = vunpack.c.l.b16 %v842
      %v1029 = vunpack.c.h.b16 %v842
      %v1030 = vunpack.c.l.b16 %v843
      %v1031 = vunpack.c.h.b16 %v843
      %v1032 = vunpack.c.l.b16 %v844
      %v1033 = vunpack.c.h.b16 %v844
      %v1034 = vunpack.c.l.b16 %v845
      %v1035 = vunpack.c.h.b16 %v845
      %v1036 = vunpack.c.l.b16 %v846
      %v1037 = vunpack.c.h.b16 %v846
      %v1038 = vunpack.c.l.b16 %v847
      %v1039 = vunpack.c.h.b16 %v847
      %v1040 = vunpack.c.l.b16 %v848
      %v1041 = vunpack.c.h.b16 %v848
      %v1042 = vunpack.c.l.b16 %v849
      %v1043 = vunpack.c.h.b16 %v849
      %v1044 = vunpack.c.l.b16 %v850
      %v1045 = vunpack.c.h.b16 %v850
      %v1046 = vunpack.c.l.b16 %v851
      %v1047 = vunpack.c.h.b16 %v851
      %v1048 = vunpack.c.l.b16 %v852
      %v1049 = vunpack.c.h.b16 %v852
      %v1050 = vunpack.c.l.b16 %v853
      %v1051 = vunpack.c.h.b16 %v853
      %v1052 = vunpack.c.l.b16 %v854
      %v1053 = vunpack.c.h.b16 %v854
      %v1054 = vunpack.c.l.b16 %v855
      %v1055 = vunpack.c.h.b16 %v855
      %v1056 = vunpack.c.l.b16 %v856
      %v1057 = vunpack.c.h.b16 %v856
      %v1058 = vunpack.c.l.b16 %v857
      %v1059 = vunpack.c.h.b16 %v857
      %v1060 = vunpack.c.l.b16 %v858
      %v1061 = vunpack.c.h.b16 %v858
      %v1062 = vunpack.c.l.b16 %v859
      %v1063 = vunpack.c.h.b16 %v859
      %v1064 = vunpack.c.l.b16 %v860
      %v1065 = vunpack.c.h.b16 %v860
      %v1066 = vunpack.c.l.b16 %v861
      %v1067 = vunpack.c.h.b16 %v861
      %v1068 = vunpack.c.l.b16 %v862
      %v1069 = vunpack.c.h.b16 %v862
      %v1070 = vunpack.c.l.b16 %v863
      %v1071 = vunpack.c.h.b16 %v863
      %v1072 = vunpack.c.l.b16 %v864
      %v1073 = vunpack.c.h.b16 %v864
      %v1074 = vunpack.c.l.b16 %v865
      %v1075 = vunpack.c.h.b16 %v865
      %v1076 = vunpack.c.l.b16 %v866
      %v1077 = vunpack.c.h.b16 %v866
      %v1078 = vunpack.c.l.b16 %v867
      %v1079 = vunpack.c.h.b16 %v867
      %v1080 = vunpack.c.l.b16 %v868
      %v1081 = vunpack.c.h.b16 %v868
      %v1082 = vunpack.c.l.b16 %v869
      %v1083 = vunpack.c.h.b16 %v869
      %v1084 = vpack.c.b16 %v960, %v956
      %v1085 = vpack.c.b16 %v961, %v957
      %v1086 = vpack.c.b16 %v962, %v958
      %v1087 = vpack.c.b16 %v963, %v959
      %v1088 = vpack.c.b16 %v968, %v964
      %v1089 = vpack.c.b16 %v969, %v965
      %v1090 = vpack.c.b16 %v970, %v966
      %v1091 = vpack.c.b16 %v971, %v967
      %v1092 = vpack.c.b16 %v976, %v972
      %v1093 = vpack.c.b16 %v977, %v973
      %v1094 = vpack.c.b16 %v978, %v974
      %v1095 = vpack.c.b16 %v979, %v975
      %v1096 = vpack.c.b16 %v984, %v980
      %v1097 = vpack.c.b16 %v985, %v981
      %v1098 = vpack.c.b16 %v986, %v982
      %v1099 = vpack.c.b16 %v987, %v983
      %v1100 = vpack.c.b16 %v992, %v988
      %v1101 = vpack.c.b16 %v993, %v989
      %v1102 = vpack.c.b16 %v994, %v990
      %v1103 = vpack.c.b16 %v995, %v991
      %v1104 = vpack.c.b16 %v1000, %v996
      %v1105 = vpack.c.b16 %v1001, %v997
      %v1106 = vpack.c.b16 %v1002, %v998
      %v1107 = vpack.c.b16 %v1003, %v999
      %v1108 = vpack.c.b16 %v1008, %v1004
      %v1109 = vpack.c.b16 %v1009, %v1005
      %v1110 = vpack.c.b16 %v1010, %v1006
      %v1111 = vpack.c.b16 %v1011, %v1007
      %v1112 = vpack.c.b16 %v1016, %v1012
      %v1113 = vpack.c.b16 %v1017, %v1013
      %v1114 = vpack.c.b16 %v1018, %v1014
      %v1115 = vpack.c.b16 %v1019, %v1015
      %v1116 = vpack.c.b16 %v1024, %v1020
      %v1117 = vpack.c.b16 %v1025, %v1021
      %v1118 = vpack.c.b16 %v1026, %v1022
      %v1119 = vpack.c.b16 %v1027, %v1023
      %v1120 = vpack.c.b16 %v1032, %v1028
      %v1121 = vpack.c.b16 %v1033, %v1029
      %v1122 = vpack.c.b16 %v1034, %v1030
      %v1123 = vpack.c.b16 %v1035, %v1031
      %v1124 = vpack.c.b16 %v1040, %v1036
      %v1125 = vpack.c.b16 %v1041, %v1037
      %v1126 = vpack.c.b16 %v1042, %v1038
      %v1127 = vpack.c.b16 %v1043, %v1039
      %v1128 = vpack.c.b16 %v1048, %v1044
      %v1129 = vpack.c.b16 %v1049, %v1045
      %v1130 = vpack.c.b16 %v1050, %v1046
      %v1131 = vpack.c.b16 %v1051, %v1047
      %v1132 = vpack.c.b16 %v1056, %v1052
      %v1133 = vpack.c.b16 %v1057, %v1053
      %v1134 = vpack.c.b16 %v1058, %v1054
      %v1135 = vpack.c.b16 %v1059, %v1055
      %v1136 = vpack.c.b16 %v1064, %v1060
      %v1137 = vpack.c.b16 %v1065, %v1061
      %v1138 = vpack.c.b16 %v1066, %v1062
      %v1139 = vpack.c.b16 %v1067, %v1063
      %v1140 = vpack.c.b16 %v1072, %v1068
      %v1141 = vpack.c.b16 %v1073, %v1069
      %v1142 = vpack.c.b16 %v1074, %v1070
      %v1143 = vpack.c.b16 %v1075, %v1071
      %v1144 = vpack.c.b16 %v1080, %v1076
      %v1145 = vpack.c.b16 %v1081, %v1077
      %v1146 = vpack.c.b16 %v1082, %v1078
      %v1147 = vpack.c.b16 %v1083, %v1079
      %1212 = vmatprep.subr.bf16.mxu0 %v1085
      %1213 = vmatpush1.bf16.msra.mxu0 %v1084
      %1214 = vmatprep.subr.bf16.mxu0 %v1089
      %1215 = vmatpush1.bf16.msra.mxu0 %v1088
      %1216 = vmatprep.subr.bf16.mxu0 %v1093
      %1217 = vmatpush1.bf16.msra.mxu0 %v1092
      %1218 = vmatprep.subr.bf16.mxu0 %v1097
      %1219 = vmatpush1.bf16.msra.mxu0 %v1096
      %1220 = vmatprep.subr.bf16.mxu0 %v1101
      %1221 = vmatpush1.bf16.msra.mxu0 %v1100
      %1222 = vmatprep.subr.bf16.mxu0 %v1105
      %1223 = vmatpush1.bf16.msra.mxu0 %v1104
      %1224 = vmatprep.subr.bf16.mxu0 %v1109
      %1225 = vmatpush1.bf16.msra.mxu0 %v1108
      %1226 = vmatprep.subr.bf16.mxu0 %v1113
      %1227 = vmatpush1.bf16.msra.mxu0 %v1112
      %1228 = vmatprep.subr.bf16.mxu0 %v1117
      %1229 = vmatpush1.bf16.msra.mxu0 %v1116
      %1230 = vmatprep.subr.bf16.mxu0 %v1121
      %1231 = vmatpush1.bf16.msra.mxu0 %v1120
      %1232 = vmatprep.subr.bf16.mxu0 %v1125
      %1233 = vmatpush1.bf16.msra.mxu0 %v1124
      %1234 = vmatprep.subr.bf16.mxu0 %v1129
      %1235 = vmatpush1.bf16.msra.mxu0 %v1128
      %1236 = vmatprep.subr.bf16.mxu0 %v1133
      %1237 = vmatpush1.bf16.msra.mxu0 %v1132
      %1238 = vmatprep.subr.bf16.mxu0 %v1137
      %1239 = vmatpush1.bf16.msra.mxu0 %v1136
      %1240 = vmatprep.subr.bf16.mxu0 %v1141
      %1241 = vmatpush1.bf16.msra.mxu0 %v1140
      %1242 = vmatprep.subr.bf16.mxu0 %v1145
      %1243 = vmatpush1.bf16.msra.mxu0 %v1144
      %1244 = vmatprep.mubr.bf16.mxu0 %v805
      %1245 = vmatmul.mubr.bf16.gmra.mrb[0].mxu0 %v804
      %v1246 = vpop.f32.mrb[0].mxu0
      %v1247 = vadd.f32 %v875, %v1246
      %v1248 = vpop.f32.mrb[0].mxu0
      %v1249 = vadd.f32 %v879, %v1248
      %v1250 = vpop.f32.mrb[0].mxu0
      %v1251 = vadd.f32 %v875, %v1250
      %v1252 = vpop.f32.mrb[0].mxu0
      %v1253 = vadd.f32 %v879, %v1252
      %1254 = vdwg.mxu0
      %1255 = vmatprep.subr.bf16.mxu0 %v1087
      %1256 = vmatpush1.bf16.msra.mxu0 %v1086
      %1257 = vmatprep.subr.bf16.mxu0 %v1091
      %1258 = vmatpush1.bf16.msra.mxu0 %v1090
      %1259 = vmatprep.subr.bf16.mxu0 %v1095
      %1260 = vmatpush1.bf16.msra.mxu0 %v1094
      %1261 = vmatprep.subr.bf16.mxu0 %v1099
      %1262 = vmatpush1.bf16.msra.mxu0 %v1098
      %1263 = vmatprep.subr.bf16.mxu0 %v1103
      %1264 = vmatpush1.bf16.msra.mxu0 %v1102
      %1265 = vmatprep.subr.bf16.mxu0 %v1107
      %1266 = vmatpush1.bf16.msra.mxu0 %v1106
      %1267 = vmatprep.subr.bf16.mxu0 %v1111
      %1268 = vmatpush1.bf16.msra.mxu0 %v1110
      %1269 = vmatprep.subr.bf16.mxu0 %v1115
      %1270 = vmatpush1.bf16.msra.mxu0 %v1114
      %1271 = vmatprep.subr.bf16.mxu0 %v1119
      %1272 = vmatpush1.bf16.msra.mxu0 %v1118
      %1273 = vmatprep.subr.bf16.mxu0 %v1123
      %1274 = vmatpush1.bf16.msra.mxu0 %v1122
      %1275 = vmatprep.subr.bf16.mxu0 %v1127
      %1276 = vmatpush1.bf16.msra.mxu0 %v1126
      %1277 = vmatprep.subr.bf16.mxu0 %v1131
      %1278 = vmatpush1.bf16.msra.mxu0 %v1130
      %1279 = vmatprep.subr.bf16.mxu0 %v1135
      %1280 = vmatpush1.bf16.msra.mxu0 %v1134
      %1281 = vmatprep.subr.bf16.mxu0 %v1139
      %1282 = vmatpush1.bf16.msra.mxu0 %v1138
      %1283 = vmatprep.subr.bf16.mxu0 %v1143
      %1284 = vmatpush1.bf16.msra.mxu0 %v1142
      %1285 = vmatprep.subr.bf16.mxu0 %v1147
      %1286 = vmatpush1.bf16.msra.mxu0 %v1146
      %1287 = vmatprep.mubr.bf16.mxu0 %v805
      %1288 = vmatmul.mubr.bf16.gmra.mrb[0].mxu0 %v804
      %v1289 = vpop.f32.mrb[0].mxu0
      %v1290 = vadd.f32 %v883, %v1289
      %v1291 = vpop.f32.mrb[0].mxu0
      %v1292 = vadd.f32 %v887, %v1291
      %v1293 = vpop.f32.mrb[0].mxu0
      %v1294 = vadd.f32 %v883, %v1293
      %v1295 = vpop.f32.mrb[0].mxu0
      %v1296 = vadd.f32 %v887, %v1295
      %1297 = vdwg.mxu0
      %v1298 = vmax.f32 %v1247, 0.0
      %v1299 = vmax.f32 %v1249, 0.0
      %v1300 = vmax.f32 %v1290, 0.0
      %v1301 = vmax.f32 %v1292, 0.0
      %v1302 = vmax.f32 %v1251, 0.0
      %v1303 = vmax.f32 %v1253, 0.0
      %v1304 = vmax.f32 %v1294, 0.0
      %v1305 = vmax.f32 %v1296, 0.0
      %v1306 = vpack.c.bf16 %v1302, %v1298
      %v1307 = vpack.c.bf16 %v1303, %v1299
      %v1308 = vpack.c.bf16 %v1304, %v1300
      %v1309 = vpack.c.bf16 %v1305, %v1301
      %v1310 = vld [vmem:[%s5] sm:$0xff]
      %v1311 = vld [vmem:[%s5 + $0x8] sm:$0xff]
      %v1312 = vld [vmem:[%s5 + $0x10] sm:$0xff]
      %v1313 = vld [vmem:[%s5 + $0x18] sm:$0xff]
      %v1314 = vld [vmem:[%s5 + $0x20] sm:$0xff]
      %v1315 = vld [vmem:[%s5 + $0x28] sm:$0xff]
      %v1316 = vld [vmem:[%s5 + $0x30] sm:$0xff]
      %v1317 = vld [vmem:[%s5 + $0x38] sm:$0xff]
      %v1318 = vld [vmem:[%s5 + $0x40] sm:$0xff]
      %v1319 = vld [vmem:[%s5 + $0x48] sm:$0xff]
      %v1320 = vld [vmem:[%s5 + $0x50] sm:$0xff]
      %v1321 = vld [vmem:[%s5 + $0x58] sm:$0xff]
      %v1322 = vld [vmem:[%s5 + $0x60] sm:$0xff]
      %v1323 = vld [vmem:[%s5 + $0x68] sm:$0xff]
      %v1324 = vld [vmem:[%s5 + $0x70] sm:$0xff]
      %v1325 = vld [vmem:[%s5 + $0x78] sm:$0xff]
      %v1326 = vld [vmem:[%s5 + $0x80] sm:$0xff]
      %v1327 = vld [vmem:[%s5 + $0x88] sm:$0xff]
      %v1328 = vld [vmem:[%s5 + $0x90] sm:$0xff]
      %v1329 = vld [vmem:[%s5 + $0x98] sm:$0xff]
      %v1330 = vld [vmem:[%s5 + $0xa0] sm:$0xff]
      %v1331 = vld [vmem:[%s5 + $0xa8] sm:$0xff]
      %v1332 = vld [vmem:[%s5 + $0xb0] sm:$0xff]
      %v1333 = vld [vmem:[%s5 + $0xb8] sm:$0xff]
      %v1334 = vld [vmem:[%s5 + $0xc0] sm:$0xff]
      %v1335 = vld [vmem:[%s5 + $0xc8] sm:$0xff]
      %v1336 = vld [vmem:[%s5 + $0xd0] sm:$0xff]
      %v1337 = vld [vmem:[%s5 + $0xd8] sm:$0xff]
      %v1338 = vld [vmem:[%s5 + $0xe0] sm:$0xff]
      %v1339 = vld [vmem:[%s5 + $0xe8] sm:$0xff]
      %v1340 = vld [vmem:[%s5 + $0xf0] sm:$0xff]
      %v1341 = vld [vmem:[%s5 + $0xf8] sm:$0xff]
      %v1342 = vld [vmem:[%s5 + $0x100] sm:$0xff]
      %v1343 = vld [vmem:[%s5 + $0x108] sm:$0xff]
      %v1344 = vld [vmem:[%s5 + $0x110] sm:$0xff]
      %v1345 = vld [vmem:[%s5 + $0x118] sm:$0xff]
      %v1346 = vld [vmem:[%s5 + $0x120] sm:$0xff]
      %v1347 = vld [vmem:[%s5 + $0x128] sm:$0xff]
      %v1348 = vld [vmem:[%s5 + $0x130] sm:$0xff]
      %v1349 = vld [vmem:[%s5 + $0x138] sm:$0xff]
      %v1350 = vld [vmem:[%s5 + $0x140] sm:$0xff]
      %v1351 = vld [vmem:[%s5 + $0x148] sm:$0xff]
      %v1352 = vld [vmem:[%s5 + $0x150] sm:$0xff]
      %v1353 = vld [vmem:[%s5 + $0x158] sm:$0xff]
      %v1354 = vld [vmem:[%s5 + $0x160] sm:$0xff]
      %v1355 = vld [vmem:[%s5 + $0x168] sm:$0xff]
      %v1356 = vld [vmem:[%s5 + $0x170] sm:$0xff]
      %v1357 = vld [vmem:[%s5 + $0x178] sm:$0xff]
      %v1358 = vld [vmem:[%s5 + $0x180] sm:$0xff]
      %v1359 = vld [vmem:[%s5 + $0x188] sm:$0xff]
      %v1360 = vld [vmem:[%s5 + $0x190] sm:$0xff]
      %v1361 = vld [vmem:[%s5 + $0x198] sm:$0xff]
      %v1362 = vld [vmem:[%s5 + $0x1a0] sm:$0xff]
      %v1363 = vld [vmem:[%s5 + $0x1a8] sm:$0xff]
      %v1364 = vld [vmem:[%s5 + $0x1b0] sm:$0xff]
      %v1365 = vld [vmem:[%s5 + $0x1b8] sm:$0xff]
      %v1366 = vld [vmem:[%s5 + $0x1c0] sm:$0xff]
      %v1367 = vld [vmem:[%s5 + $0x1c8] sm:$0xff]
      %v1368 = vld [vmem:[%s5 + $0x1d0] sm:$0xff]
      %v1369 = vld [vmem:[%s5 + $0x1d8] sm:$0xff]
      %v1370 = vld [vmem:[%s5 + $0x1e0] sm:$0xff]
      %v1371 = vld [vmem:[%s5 + $0x1e8] sm:$0xff]
      %v1372 = vld [vmem:[%s5 + $0x1f0] sm:$0xff]
      %v1373 = vld [vmem:[%s5 + $0x1f8] sm:$0xff]
      %v1374 = vld [vmem:[%s6] sm:$0x3]
      %v1376 = vlaneseq
      %v1377 = vshrl.u32 %v1376, 7
      %v1378 = vsub.s32 0, %v1377
      %v1379 = vrot.slane %v1374, %v1378
      %v1380 = vlaneseq
      %v1381 = vshrl.u32 %v1380, 7
      %v1382 = vsub.s32 1, %v1381
      %v1383 = vrot.slane %v1374, %v1382
      %v1450 = vunpack.c.l.b16 %v1310
      %v1451 = vunpack.c.h.b16 %v1310
      %v1452 = vunpack.c.l.b16 %v1311
      %v1453 = vunpack.c.h.b16 %v1311
      %v1454 = vunpack.c.l.b16 %v1312
      %v1455 = vunpack.c.h.b16 %v1312
      %v1456 = vunpack.c.l.b16 %v1313
      %v1457 = vunpack.c.h.b16 %v1313
      %v1458 = vunpack.c.l.b16 %v1314
      %v1459 = vunpack.c.h.b16 %v1314
      %v1460 = vunpack.c.l.b16 %v1315
      %v1461 = vunpack.c.h.b16 %v1315
      %v1462 = vunpack.c.l.b16 %v1316
      %v1463 = vunpack.c.h.b16 %v1316
      %v1464 = vunpack.c.l.b16 %v1317
      %v1465 = vunpack.c.h.b16 %v1317
      %v1466 = vunpack.c.l.b16 %v1318
      %v1467 = vunpack.c.h.b16 %v1318
      %v1468 = vunpack.c.l.b16 %v1319
      %v1469 = vunpack.c.h.b16 %v1319
      %v1470 = vunpack.c.l.b16 %v1320
      %v1471 = vunpack.c.h.b16 %v1320
      %v1472 = vunpack.c.l.b16 %v1321
      %v1473 = vunpack.c.h.b16 %v1321
      %v1474 = vunpack.c.l.b16 %v1322
      %v1475 = vunpack.c.h.b16 %v1322
      %v1476 = vunpack.c.l.b16 %v1323
      %v1477 = vunpack.c.h.b16 %v1323
      %v1478 = vunpack.c.l.b16 %v1324
      %v1479 = vunpack.c.h.b16 %v1324
      %v1480 = vunpack.c.l.b16 %v1325
      %v1481 = vunpack.c.h.b16 %v1325
      %v1482 = vunpack.c.l.b16 %v1326
      %v1483 = vunpack.c.h.b16 %v1326
      %v1484 = vunpack.c.l.b16 %v1327
      %v1485 = vunpack.c.h.b16 %v1327
      %v1486 = vunpack.c.l.b16 %v1328
      %v1487 = vunpack.c.h.b16 %v1328
      %v1488 = vunpack.c.l.b16 %v1329
      %v1489 = vunpack.c.h.b16 %v1329
      %v1490 = vunpack.c.l.b16 %v1330
      %v1491 = vunpack.c.h.b16 %v1330
      %v1492 = vunpack.c.l.b16 %v1331
      %v1493 = vunpack.c.h.b16 %v1331
      %v1494 = vunpack.c.l.b16 %v1332
      %v1495 = vunpack.c.h.b16 %v1332
      %v1496 = vunpack.c.l.b16 %v1333
      %v1497 = vunpack.c.h.b16 %v1333
      %v1498 = vunpack.c.l.b16 %v1334
      %v1499 = vunpack.c.h.b16 %v1334
      %v1500 = vunpack.c.l.b16 %v1335
      %v1501 = vunpack.c.h.b16 %v1335
      %v1502 = vunpack.c.l.b16 %v1336
      %v1503 = vunpack.c.h.b16 %v1336
      %v1504 = vunpack.c.l.b16 %v1337
      %v1505 = vunpack.c.h.b16 %v1337
      %v1506 = vunpack.c.l.b16 %v1338
      %v1507 = vunpack.c.h.b16 %v1338
      %v1508 = vunpack.c.l.b16 %v1339
      %v1509 = vunpack.c.h.b16 %v1339
      %v1510 = vunpack.c.l.b16 %v1340
      %v1511 = vunpack.c.h.b16 %v1340
      %v1512 = vunpack.c.l.b16 %v1341
      %v1513 = vunpack.c.h.b16 %v1341
      %v1514 = vunpack.c.l.b16 %v1342
      %v1515 = vunpack.c.h.b16 %v1342
      %v1516 = vunpack.c.l.b16 %v1343
      %v1517 = vunpack.c.h.b16 %v1343
      %v1518 = vunpack.c.l.b16 %v1344
      %v1519 = vunpack.c.h.b16 %v1344
      %v1520 = vunpack.c.l.b16 %v1345
      %v1521 = vunpack.c.h.b16 %v1345
      %v1522 = vunpack.c.l.b16 %v1346
      %v1523 = vunpack.c.h.b16 %v1346
      %v1524 = vunpack.c.l.b16 %v1347
      %v1525 = vunpack.c.h.b16 %v1347
      %v1526 = vunpack.c.l.b16 %v1348
      %v1527 = vunpack.c.h.b16 %v1348
      %v1528 = vunpack.c.l.b16 %v1349
      %v1529 = vunpack.c.h.b16 %v1349
      %v1530 = vunpack.c.l.b16 %v1350
      %v1531 = vunpack.c.h.b16 %v1350
      %v1532 = vunpack.c.l.b16 %v1351
      %v1533 = vunpack.c.h.b16 %v1351
      %v1534 = vunpack.c.l.b16 %v1352
      %v1535 = vunpack.c.h.b16 %v1352
      %v1536 = vunpack.c.l.b16 %v1353
      %v1537 = vunpack.c.h.b16 %v1353
      %v1538 = vunpack.c.l.b16 %v1354
      %v1539 = vunpack.c.h.b16 %v1354
      %v1540 = vunpack.c.l.b16 %v1355
      %v1541 = vunpack.c.h.b16 %v1355
      %v1542 = vunpack.c.l.b16 %v1356
      %v1543 = vunpack.c.h.b16 %v1356
      %v1544 = vunpack.c.l.b16 %v1357
      %v1545 = vunpack.c.h.b16 %v1357
      %v1546 = vunpack.c.l.b16 %v1358
      %v1547 = vunpack.c.h.b16 %v1358
      %v1548 = vunpack.c.l.b16 %v1359
      %v1549 = vunpack.c.h.b16 %v1359
      %v1550 = vunpack.c.l.b16 %v1360
      %v1551 = vunpack.c.h.b16 %v1360
      %v1552 = vunpack.c.l.b16 %v1361
      %v1553 = vunpack.c.h.b16 %v1361
      %v1554 = vunpack.c.l.b16 %v1362
      %v1555 = vunpack.c.h.b16 %v1362
      %v1556 = vunpack.c.l.b16 %v1363
      %v1557 = vunpack.c.h.b16 %v1363
      %v1558 = vunpack.c.l.b16 %v1364
      %v1559 = vunpack.c.h.b16 %v1364
      %v1560 = vunpack.c.l.b16 %v1365
      %v1561 = vunpack.c.h.b16 %v1365
      %v1562 = vunpack.c.l.b16 %v1366
      %v1563 = vunpack.c.h.b16 %v1366
      %v1564 = vunpack.c.l.b16 %v1367
      %v1565 = vunpack.c.h.b16 %v1367
      %v1566 = vunpack.c.l.b16 %v1368
      %v1567 = vunpack.c.h.b16 %v1368
      %v1568 = vunpack.c.l.b16 %v1369
      %v1569 = vunpack.c.h.b16 %v1369
      %v1570 = vunpack.c.l.b16 %v1370
      %v1571 = vunpack.c.h.b16 %v1370
      %v1572 = vunpack.c.l.b16 %v1371
      %v1573 = vunpack.c.h.b16 %v1371
      %v1574 = vunpack.c.l.b16 %v1372
      %v1575 = vunpack.c.h.b16 %v1372
      %v1576 = vunpack.c.l.b16 %v1373
      %v1577 = vunpack.c.h.b16 %v1373
      %v1578 = vpack.c.b16 %v1452, %v1450
      %v1579 = vpack.c.b16 %v1453, %v1451
      %v1580 = vpack.c.b16 %v1456, %v1454
      %v1581 = vpack.c.b16 %v1457, %v1455
      %v1582 = vpack.c.b16 %v1460, %v1458
      %v1583 = vpack.c.b16 %v1461, %v1459
      %v1584 = vpack.c.b16 %v1464, %v1462
      %v1585 = vpack.c.b16 %v1465, %v1463
      %v1586 = vpack.c.b16 %v1468, %v1466
      %v1587 = vpack.c.b16 %v1469, %v1467
      %v1588 = vpack.c.b16 %v1472, %v1470
      %v1589 = vpack.c.b16 %v1473, %v1471
      %v1590 = vpack.c.b16 %v1476, %v1474
      %v1591 = vpack.c.b16 %v1477, %v1475
      %v1592 = vpack.c.b16 %v1480, %v1478
      %v1593 = vpack.c.b16 %v1481, %v1479
      %v1594 = vpack.c.b16 %v1484, %v1482
      %v1595 = vpack.c.b16 %v1485, %v1483
      %v1596 = vpack.c.b16 %v1488, %v1486
      %v1597 = vpack.c.b16 %v1489, %v1487
      %v1598 = vpack.c.b16 %v1492, %v1490
      %v1599 = vpack.c.b16 %v1493, %v1491
      %v1600 = vpack.c.b16 %v1496, %v1494
      %v1601 = vpack.c.b16 %v1497, %v1495
      %v1602 = vpack.c.b16 %v1500, %v1498
      %v1603 = vpack.c.b16 %v1501, %v1499
      %v1604 = vpack.c.b16 %v1504, %v1502
      %v1605 = vpack.c.b16 %v1505, %v1503
      %v1606 = vpack.c.b16 %v1508, %v1506
      %v1607 = vpack.c.b16 %v1509, %v1507
      %v1608 = vpack.c.b16 %v1512, %v1510
      %v1609 = vpack.c.b16 %v1513, %v1511
      %v1610 = vpack.c.b16 %v1516, %v1514
      %v1611 = vpack.c.b16 %v1517, %v1515
      %v1612 = vpack.c.b16 %v1520, %v1518
      %v1613 = vpack.c.b16 %v1521, %v1519
      %v1614 = vpack.c.b16 %v1524, %v1522
      %v1615 = vpack.c.b16 %v1525, %v1523
      %v1616 = vpack.c.b16 %v1528, %v1526
      %v1617 = vpack.c.b16 %v1529, %v1527
      %v1618 = vpack.c.b16 %v1532, %v1530
      %v1619 = vpack.c.b16 %v1533, %v1531
      %v1620 = vpack.c.b16 %v1536, %v1534
      %v1621 = vpack.c.b16 %v1537, %v1535
      %v1622 = vpack.c.b16 %v1540, %v1538
      %v1623 = vpack.c.b16 %v1541, %v1539
      %v1624 = vpack.c.b16 %v1544, %v1542
      %v1625 = vpack.c.b16 %v1545, %v1543
      %v1626 = vpack.c.b16 %v1548, %v1546
      %v1627 = vpack.c.b16 %v1549, %v1547
      %v1628 = vpack.c.b16 %v1552, %v1550
      %v1629 = vpack.c.b16 %v1553, %v1551
      %v1630 = vpack.c.b16 %v1556, %v1554
      %v1631 = vpack.c.b16 %v1557, %v1555
      %v1632 = vpack.c.b16 %v1560, %v1558
      %v1633 = vpack.c.b16 %v1561, %v1559
      %v1634 = vpack.c.b16 %v1564, %v1562
      %v1635 = vpack.c.b16 %v1565, %v1563
      %v1636 = vpack.c.b16 %v1568, %v1566
      %v1637 = vpack.c.b16 %v1569, %v1567
      %v1638 = vpack.c.b16 %v1572, %v1570
      %v1639 = vpack.c.b16 %v1573, %v1571
      %v1640 = vpack.c.b16 %v1576, %v1574
      %v1641 = vpack.c.b16 %v1577, %v1575
      %1706 = vmatprep.subr.bf16.mxu0 %v1579
      %1707 = vmatpush1.bf16.msra.mxu0 %v1578
      %1708 = vmatprep.subr.bf16.mxu0 %v1581
      %1709 = vmatpush1.bf16.msra.mxu0 %v1580
      %1710 = vmatprep.subr.bf16.mxu0 %v1583
      %1711 = vmatpush1.bf16.msra.mxu0 %v1582
      %1712 = vmatprep.subr.bf16.mxu0 %v1585
      %1713 = vmatpush1.bf16.msra.mxu0 %v1584
      %1714 = vmatprep.subr.bf16.mxu0 %v1587
      %1715 = vmatpush1.bf16.msra.mxu0 %v1586
      %1716 = vmatprep.subr.bf16.mxu0 %v1589
      %1717 = vmatpush1.bf16.msra.mxu0 %v1588
      %1718 = vmatprep.subr.bf16.mxu0 %v1591
      %1719 = vmatpush1.bf16.msra.mxu0 %v1590
      %1720 = vmatprep.subr.bf16.mxu0 %v1593
      %1721 = vmatpush1.bf16.msra.mxu0 %v1592
      %1722 = vmatprep.subr.bf16.mxu0 %v1595
      %1723 = vmatpush1.bf16.msra.mxu0 %v1594
      %1724 = vmatprep.subr.bf16.mxu0 %v1597
      %1725 = vmatpush1.bf16.msra.mxu0 %v1596
      %1726 = vmatprep.subr.bf16.mxu0 %v1599
      %1727 = vmatpush1.bf16.msra.mxu0 %v1598
      %1728 = vmatprep.subr.bf16.mxu0 %v1601
      %1729 = vmatpush1.bf16.msra.mxu0 %v1600
      %1730 = vmatprep.subr.bf16.mxu0 %v1603
      %1731 = vmatpush1.bf16.msra.mxu0 %v1602
      %1732 = vmatprep.subr.bf16.mxu0 %v1605
      %1733 = vmatpush1.bf16.msra.mxu0 %v1604
      %1734 = vmatprep.subr.bf16.mxu0 %v1607
      %1735 = vmatpush1.bf16.msra.mxu0 %v1606
      %1736 = vmatprep.subr.bf16.mxu0 %v1609
      %1737 = vmatpush1.bf16.msra.mxu0 %v1608
      %1738 = vmatprep.mubr.bf16.mxu0 %v1307
      %1739 = vmatmul.mubr.bf16.gmra.mrb[0].mxu0 %v1306
      %v1740 = vpop.f32.mrb[0].mxu0
      %v1741 = vadd.f32 %v1379, %v1740
      %v1742 = vpop.f32.mrb[0].mxu0
      %v1743 = vadd.f32 %v1383, %v1742
      %v1744 = vpop.f32.mrb[0].mxu0
      %v1745 = vadd.f32 %v1379, %v1744
      %v1746 = vpop.f32.mrb[0].mxu0
      %v1747 = vadd.f32 %v1383, %v1746
      %1748 = vdwg.mxu0
      %1749 = vmatprep.subr.bf16.mxu0 %v1611
      %1750 = vmatpush1.bf16.msra.mxu0 %v1610
      %1751 = vmatprep.subr.bf16.mxu0 %v1613
      %1752 = vmatpush1.bf16.msra.mxu0 %v1612
      %1753 = vmatprep.subr.bf16.mxu0 %v1615
      %1754 = vmatpush1.bf16.msra.mxu0 %v1614
      %1755 = vmatprep.subr.bf16.mxu0 %v1617
      %1756 = vmatpush1.bf16.msra.mxu0 %v1616
      %1757 = vmatprep.subr.bf16.mxu0 %v1619
      %1758 = vmatpush1.bf16.msra.mxu0 %v1618
      %1759 = vmatprep.subr.bf16.mxu0 %v1621
      %1760 = vmatpush1.bf16.msra.mxu0 %v1620
      %1761 = vmatprep.subr.bf16.mxu0 %v1623
      %1762 = vmatpush1.bf16.msra.mxu0 %v1622
      %1763 = vmatprep.subr.bf16.mxu0 %v1625
      %1764 = vmatpush1.bf16.msra.mxu0 %v1624
      %1765 = vmatprep.subr.bf16.mxu0 %v1627
      %1766 = vmatpush1.bf16.msra.mxu0 %v1626
      %1767 = vmatprep.subr.bf16.mxu0 %v1629
      %1768 = vmatpush1.bf16.msra.mxu0 %v1628
      %1769 = vmatprep.subr.bf16.mxu0 %v1631
      %1770 = vmatpush1.bf16.msra.mxu0 %v1630
      %1771 = vmatprep.subr.bf16.mxu0 %v1633
      %1772 = vmatpush1.bf16.msra.mxu0 %v1632
      %1773 = vmatprep.subr.bf16.mxu0 %v1635
      %1774 = vmatpush1.bf16.msra.mxu0 %v1634
      %1775 = vmatprep.subr.bf16.mxu0 %v1637
      %1776 = vmatpush1.bf16.msra.mxu0 %v1636
      %1777 = vmatprep.subr.bf16.mxu0 %v1639
      %1778 = vmatpush1.bf16.msra.mxu0 %v1638
      %1779 = vmatprep.subr.bf16.mxu0 %v1641
      %1780 = vmatpush1.bf16.msra.mxu0 %v1640
      %1781 = vmatprep.mubr.bf16.mxu0 %v1309
      %1782 = vmatmul.mubr.bf16.gmra.mrb[0].mxu0 %v1308
      %v1783 = vpop.f32.mrb[0].mxu0
      %v1784 = vadd.f32 %v1741, %v1783
      %v1785 = vpop.f32.mrb[0].mxu0
      %v1786 = vadd.f32 %v1743, %v1785
      %v1787 = vpop.f32.mrb[0].mxu0
      %v1788 = vadd.f32 %v1745, %v1787
      %v1789 = vpop.f32.mrb[0].mxu0
      %v1790 = vadd.f32 %v1747, %v1789
      %1791 = vdwg.mxu0
      %v1792 = vmax.f32 %v1784, 0.0
      %v1793 = vmax.f32 %v1786, 0.0
      %v1794 = vmax.f32 %v1788, 0.0
      %v1795 = vmax.f32 %v1790, 0.0
      %v1796 = vpack.c.bf16 %v1794, %v1792
      %v1797 = vpack.c.bf16 %v1795, %v1793
      %v1798 = vld [vmem:[%s7] sm:$0xff]
      %v1799 = vld [vmem:[%s7 + $0x8] sm:$0xff]
      %v1800 = vld [vmem:[%s7 + $0x10] sm:$0xff]
      %v1801 = vld [vmem:[%s7 + $0x18] sm:$0xff]
      %v1802 = vld [vmem:[%s7 + $0x20] sm:$0xff]
      %v1803 = vld [vmem:[%s7 + $0x28] sm:$0xff]
      %v1804 = vld [vmem:[%s7 + $0x30] sm:$0xff]
      %v1805 = vld [vmem:[%s7 + $0x38] sm:$0xff]
      %v1806 = vld [vmem:[%s7 + $0x40] sm:$0xff]
      %v1807 = vld [vmem:[%s7 + $0x48] sm:$0xff]
      %v1808 = vld [vmem:[%s7 + $0x50] sm:$0xff]
      %v1809 = vld [vmem:[%s7 + $0x58] sm:$0xff]
      %v1810 = vld [vmem:[%s7 + $0x60] sm:$0xff]
      %v1811 = vld [vmem:[%s7 + $0x68] sm:$0xff]
      %v1812 = vld [vmem:[%s7 + $0x70] sm:$0xff]
      %v1813 = vld [vmem:[%s7 + $0x78] sm:$0xff]
      %v1814 = vld [vmem:[%s7 + $0x80] sm:$0xff]
      %v1815 = vld [vmem:[%s7 + $0x88] sm:$0xff]
      %v1816 = vld [vmem:[%s7 + $0x90] sm:$0xff]
      %v1817 = vld [vmem:[%s7 + $0x98] sm:$0xff]
      %v1818 = vld [vmem:[%s7 + $0xa0] sm:$0xff]
      %v1819 = vld [vmem:[%s7 + $0xa8] sm:$0xff]
      %v1820 = vld [vmem:[%s7 + $0xb0] sm:$0xff]
      %v1821 = vld [vmem:[%s7 + $0xb8] sm:$0xff]
      %v1822 = vld [vmem:[%s7 + $0xc0] sm:$0xff]
      %v1823 = vld [vmem:[%s7 + $0xc8] sm:$0xff]
      %v1824 = vld [vmem:[%s7 + $0xd0] sm:$0xff]
      %v1825 = vld [vmem:[%s7 + $0xd8] sm:$0xff]
      %v1826 = vld [vmem:[%s7 + $0xe0] sm:$0xff]
      %v1827 = vld [vmem:[%s7 + $0xe8] sm:$0xff]
      %v1828 = vld [vmem:[%s7 + $0xf0] sm:$0xff]
      %v1829 = vld [vmem:[%s7 + $0xf8] sm:$0xff]
      %v1830 = vld [vmem:[%s8] sm:$0x3]
      %v1832 = vlaneseq
      %v1833 = vshrl.u32 %v1832, 7
      %v1834 = vsub.s32 0, %v1833
      %v1835 = vrot.slane %v1830, %v1834
      %v1836 = vlaneseq
      %v1837 = vshrl.u32 %v1836, 7
      %v1838 = vsub.s32 1, %v1837
      %v1839 = vrot.slane %v1830, %v1838
      %v1874 = vunpack.c.l.b16 %v1798
      %v1875 = vunpack.c.h.b16 %v1798
      %v1876 = vunpack.c.l.b16 %v1799
      %v1877 = vunpack.c.h.b16 %v1799
      %v1878 = vunpack.c.l.b16 %v1800
      %v1879 = vunpack.c.h.b16 %v1800
      %v1880 = vunpack.c.l.b16 %v1801
      %v1881 = vunpack.c.h.b16 %v1801
      %v1882 = vunpack.c.l.b16 %v1802
      %v1883 = vunpack.c.h.b16 %v1802
      %v1884 = vunpack.c.l.b16 %v1803
      %v1885 = vunpack.c.h.b16 %v1803
      %v1886 = vunpack.c.l.b16 %v1804
      %v1887 = vunpack.c.h.b16 %v1804
      %v1888 = vunpack.c.l.b16 %v1805
      %v1889 = vunpack.c.h.b16 %v1805
      %v1890 = vunpack.c.l.b16 %v1806
      %v1891 = vunpack.c.h.b16 %v1806
      %v1892 = vunpack.c.l.b16 %v1807
      %v1893 = vunpack.c.h.b16 %v1807
      %v1894 = vunpack.c.l.b16 %v1808
      %v1895 = vunpack.c.h.b16 %v1808
      %v1896 = vunpack.c.l.b16 %v1809
      %v1897 = vunpack.c.h.b16 %v1809
      %v1898 = vunpack.c.l.b16 %v1810
      %v1899 = vunpack.c.h.b16 %v1810
      %v1900 = vunpack.c.l.b16 %v1811
      %v1901 = vunpack.c.h.b16 %v1811
      %v1902 = vunpack.c.l.b16 %v1812
      %v1903 = vunpack.c.h.b16 %v1812
      %v1904 = vunpack.c.l.b16 %v1813
      %v1905 = vunpack.c.h.b16 %v1813
      %v1906 = vunpack.c.l.b16 %v1814
      %v1907 = vunpack.c.h.b16 %v1814
      %v1908 = vunpack.c.l.b16 %v1815
      %v1909 = vunpack.c.h.b16 %v1815
      %v1910 = vunpack.c.l.b16 %v1816
      %v1911 = vunpack.c.h.b16 %v1816
      %v1912 = vunpack.c.l.b16 %v1817
      %v1913 = vunpack.c.h.b16 %v1817
      %v1914 = vunpack.c.l.b16 %v1818
      %v1915 = vunpack.c.h.b16 %v1818
      %v1916 = vunpack.c.l.b16 %v1819
      %v1917 = vunpack.c.h.b16 %v1819
      %v1918 = vunpack.c.l.b16 %v1820
      %v1919 = vunpack.c.h.b16 %v1820
      %v1920 = vunpack.c.l.b16 %v1821
      %v1921 = vunpack.c.h.b16 %v1821
      %v1922 = vunpack.c.l.b16 %v1822
      %v1923 = vunpack.c.h.b16 %v1822
      %v1924 = vunpack.c.l.b16 %v1823
      %v1925 = vunpack.c.h.b16 %v1823
      %v1926 = vunpack.c.l.b16 %v1824
      %v1927 = vunpack.c.h.b16 %v1824
      %v1928 = vunpack.c.l.b16 %v1825
      %v1929 = vunpack.c.h.b16 %v1825
      %v1930 = vunpack.c.l.b16 %v1826
      %v1931 = vunpack.c.h.b16 %v1826
      %v1932 = vunpack.c.l.b16 %v1827
      %v1933 = vunpack.c.h.b16 %v1827
      %v1934 = vunpack.c.l.b16 %v1828
      %v1935 = vunpack.c.h.b16 %v1828
      %v1936 = vunpack.c.l.b16 %v1829
      %v1937 = vunpack.c.h.b16 %v1829
      %v1938 = vpack.c.b16 %v1876, %v1874
      %v1939 = vpack.c.b16 %v1877, %v1875
      %v1940 = vpack.c.b16 %v1880, %v1878
      %v1941 = vpack.c.b16 %v1881, %v1879
      %v1942 = vpack.c.b16 %v1884, %v1882
      %v1943 = vpack.c.b16 %v1885, %v1883
      %v1944 = vpack.c.b16 %v1888, %v1886
      %v1945 = vpack.c.b16 %v1889, %v1887
      %v1946 = vpack.c.b16 %v1892, %v1890
      %v1947 = vpack.c.b16 %v1893, %v1891
      %v1948 = vpack.c.b16 %v1896, %v1894
      %v1949 = vpack.c.b16 %v1897, %v1895
      %v1950 = vpack.c.b16 %v1900, %v1898
      %v1951 = vpack.c.b16 %v1901, %v1899
      %v1952 = vpack.c.b16 %v1904, %v1902
      %v1953 = vpack.c.b16 %v1905, %v1903
      %v1954 = vpack.c.b16 %v1908, %v1906
      %v1955 = vpack.c.b16 %v1909, %v1907
      %v1956 = vpack.c.b16 %v1912, %v1910
      %v1957 = vpack.c.b16 %v1913, %v1911
      %v1958 = vpack.c.b16 %v1916, %v1914
      %v1959 = vpack.c.b16 %v1917, %v1915
      %v1960 = vpack.c.b16 %v1920, %v1918
      %v1961 = vpack.c.b16 %v1921, %v1919
      %v1962 = vpack.c.b16 %v1924, %v1922
      %v1963 = vpack.c.b16 %v1925, %v1923
      %v1964 = vpack.c.b16 %v1928, %v1926
      %v1965 = vpack.c.b16 %v1929, %v1927
      %v1966 = vpack.c.b16 %v1932, %v1930
      %v1967 = vpack.c.b16 %v1933, %v1931
      %v1968 = vpack.c.b16 %v1936, %v1934
      %v1969 = vpack.c.b16 %v1937, %v1935
      %2002 = vmatprep.subr.bf16.mxu0 %v1939
      %2003 = vmatpush1.bf16.msra.mxu0 %v1938
      %2004 = vmatprep.subr.bf16.mxu0 %v1941
      %2005 = vmatpush1.bf16.msra.mxu0 %v1940
      %2006 = vmatprep.subr.bf16.mxu0 %v1943
      %2007 = vmatpush1.bf16.msra.mxu0 %v1942
      %2008 = vmatprep.subr.bf16.mxu0 %v1945
      %2009 = vmatpush1.bf16.msra.mxu0 %v1944
      %2010 = vmatprep.subr.bf16.mxu0 %v1947
      %2011 = vmatpush1.bf16.msra.mxu0 %v1946
      %2012 = vmatprep.subr.bf16.mxu0 %v1949
      %2013 = vmatpush1.bf16.msra.mxu0 %v1948
      %2014 = vmatprep.subr.bf16.mxu0 %v1951
      %2015 = vmatpush1.bf16.msra.mxu0 %v1950
      %2016 = vmatprep.subr.bf16.mxu0 %v1953
      %2017 = vmatpush1.bf16.msra.mxu0 %v1952
      %2018 = vmatprep.subr.bf16.mxu0 %v1955
      %2019 = vmatpush1.bf16.msra.mxu0 %v1954
      %2020 = vmatprep.subr.bf16.mxu0 %v1957
      %2021 = vmatpush1.bf16.msra.mxu0 %v1956
      %2022 = vmatprep.subr.bf16.mxu0 %v1959
      %2023 = vmatpush1.bf16.msra.mxu0 %v1958
      %2024 = vmatprep.subr.bf16.mxu0 %v1961
      %2025 = vmatpush1.bf16.msra.mxu0 %v1960
      %2026 = vmatprep.subr.bf16.mxu0 %v1963
      %2027 = vmatpush1.bf16.msra.mxu0 %v1962
      %2028 = vmatprep.subr.bf16.mxu0 %v1965
      %2029 = vmatpush1.bf16.msra.mxu0 %v1964
      %2030 = vmatprep.subr.bf16.mxu0 %v1967
      %2031 = vmatpush1.bf16.msra.mxu0 %v1966
      %2032 = vmatprep.subr.bf16.mxu0 %v1969
      %2033 = vmatpush1.bf16.msra.mxu0 %v1968
      %2034 = vmatprep.mubr.bf16.mxu0 %v1797
      %2035 = vmatmul.mubr.bf16.gmra.mrb[0].mxu0 %v1796
      %v2036 = vpop.f32.mrb[0].mxu0
      %v2037 = vadd.f32 %v1835, %v2036
      %v2038 = vpop.f32.mrb[0].mxu0
      %v2039 = vadd.f32 %v1839, %v2038
      %v2040 = vpop.f32.mrb[0].mxu0
      %v2041 = vadd.f32 %v1835, %v2040
      %v2042 = vpop.f32.mrb[0].mxu0
      %v2043 = vadd.f32 %v1839, %v2042
      %2044 = vdwg.mxu0
      %v2045 = vmax.f32 %v2037, 0.0
      %v2046 = vmax.f32 %v2039, 0.0
      %v2047 = vmax.f32 %v2041, 0.0
      %v2048 = vmax.f32 %v2043, 0.0
      %v2049 = vpack.c.bf16 %v2047, %v2045
      %v2050 = vpack.c.bf16 %v2048, %v2046
      %v2051 = vld [vmem:[%s9] sm:$0xf]
      %v2052 = vld [vmem:[%s9 + $0x4] sm:$0xf]
      %v2053 = vld [vmem:[%s9 + $0x8] sm:$0xf]
      %v2054 = vld [vmem:[%s9 + $0xc] sm:$0xf]
      %v2055 = vld [vmem:[%s9 + $0x10] sm:$0xf]
      %v2056 = vld [vmem:[%s9 + $0x14] sm:$0xf]
      %v2057 = vld [vmem:[%s9 + $0x18] sm:$0xf]
      %v2058 = vld [vmem:[%s9 + $0x1c] sm:$0xf]
      %v2059 = vld [vmem:[%s9 + $0x20] sm:$0xf]
      %v2060 = vld [vmem:[%s9 + $0x24] sm:$0xf]
      %v2061 = vld [vmem:[%s9 + $0x28] sm:$0xf]
      %v2062 = vld [vmem:[%s9 + $0x2c] sm:$0xf]
      %v2063 = vld [vmem:[%s9 + $0x30] sm:$0xf]
      %v2064 = vld [vmem:[%s9 + $0x34] sm:$0xf]
      %v2065 = vld [vmem:[%s9 + $0x38] sm:$0xf]
      %v2066 = vld [vmem:[%s9 + $0x3c] sm:$0xf]
      %v2067 = vld [vmem:[%s9 + $0x40] sm:$0xf]
      %v2068 = vld [vmem:[%s9 + $0x44] sm:$0xf]
      %v2069 = vld [vmem:[%s9 + $0x48] sm:$0xf]
      %v2070 = vld [vmem:[%s9 + $0x4c] sm:$0xf]
      %v2071 = vld [vmem:[%s9 + $0x50] sm:$0xf]
      %v2072 = vld [vmem:[%s9 + $0x54] sm:$0xf]
      %v2073 = vld [vmem:[%s9 + $0x58] sm:$0xf]
      %v2074 = vld [vmem:[%s9 + $0x5c] sm:$0xf]
      %v2075 = vld [vmem:[%s9 + $0x60] sm:$0xf]
      %v2076 = vld [vmem:[%s9 + $0x64] sm:$0xf]
      %v2077 = vld [vmem:[%s9 + $0x68] sm:$0xf]
      %v2078 = vld [vmem:[%s9 + $0x6c] sm:$0xf]
      %v2079 = vld [vmem:[%s9 + $0x70] sm:$0xf]
      %v2080 = vld [vmem:[%s9 + $0x74] sm:$0xf]
      %v2081 = vld [vmem:[%s9 + $0x78] sm:$0xf]
      %v2082 = vld [vmem:[%s9 + $0x7c] sm:$0xf]
      %v2083 = vld [vmem:[%s10] sm:$0x1]
      %v2085 = vlaneseq
      %v2086 = vshrl.u32 %v2085, 7
      %v2087 = vsub.s32 0, %v2086
      %v2088 = vrot.slane %v2083, %v2087
      %v2122 = vunpack.c.l.b16 %v2051
      %v2123 = vunpack.c.l.b16 %v2052
      %v2124 = vunpack.c.l.b16 %v2053
      %v2125 = vunpack.c.l.b16 %v2054
      %v2126 = vunpack.c.l.b16 %v2055
      %v2127 = vunpack.c.l.b16 %v2056
      %v2128 = vunpack.c.l.b16 %v2057
      %v2129 = vunpack.c.l.b16 %v2058
      %v2130 = vunpack.c.l.b16 %v2059
      %v2131 = vunpack.c.l.b16 %v2060
      %v2132 = vunpack.c.l.b16 %v2061
      %v2133 = vunpack.c.l.b16 %v2062
      %v2134 = vunpack.c.l.b16 %v2063
      %v2135 = vunpack.c.l.b16 %v2064
      %v2136 = vunpack.c.l.b16 %v2065
      %v2137 = vunpack.c.l.b16 %v2066
      %v2138 = vunpack.c.l.b16 %v2067
      %v2139 = vunpack.c.l.b16 %v2068
      %v2140 = vunpack.c.l.b16 %v2069
      %v2141 = vunpack.c.l.b16 %v2070
      %v2142 = vunpack.c.l.b16 %v2071
      %v2143 = vunpack.c.l.b16 %v2072
      %v2144 = vunpack.c.l.b16 %v2073
      %v2145 = vunpack.c.l.b16 %v2074
      %v2146 = vunpack.c.l.b16 %v2075
      %v2147 = vunpack.c.l.b16 %v2076
      %v2148 = vunpack.c.l.b16 %v2077
      %v2149 = vunpack.c.l.b16 %v2078
      %v2150 = vunpack.c.l.b16 %v2079
      %v2151 = vunpack.c.l.b16 %v2080
      %v2152 = vunpack.c.l.b16 %v2081
      %v2153 = vunpack.c.l.b16 %v2082
      %v2154 = vpack.c.b16 %v2123, %v2122
      %v2155 = vpack.c.b16 %v2125, %v2124
      %v2156 = vpack.c.b16 %v2127, %v2126
      %v2157 = vpack.c.b16 %v2129, %v2128
      %v2158 = vpack.c.b16 %v2131, %v2130
      %v2159 = vpack.c.b16 %v2133, %v2132
      %v2160 = vpack.c.b16 %v2135, %v2134
      %v2161 = vpack.c.b16 %v2137, %v2136
      %v2162 = vpack.c.b16 %v2139, %v2138
      %v2163 = vpack.c.b16 %v2141, %v2140
      %v2164 = vpack.c.b16 %v2143, %v2142
      %v2165 = vpack.c.b16 %v2145, %v2144
      %v2166 = vpack.c.b16 %v2147, %v2146
      %v2167 = vpack.c.b16 %v2149, %v2148
      %v2168 = vpack.c.b16 %v2151, %v2150
      %v2169 = vpack.c.b16 %v2153, %v2152
      %2186 = vmatprep.subr.bf16.mxu0 0
      %2187 = vmatpush1.bf16.msra.mxu0 %v2154
      %2188 = vmatprep.subr.bf16.mxu0 0
      %2189 = vmatpush1.bf16.msra.mxu0 %v2155
      %2190 = vmatprep.subr.bf16.mxu0 0
      %2191 = vmatpush1.bf16.msra.mxu0 %v2156
      %2192 = vmatprep.subr.bf16.mxu0 0
      %2193 = vmatpush1.bf16.msra.mxu0 %v2157
      %2194 = vmatprep.subr.bf16.mxu0 0
      %2195 = vmatpush1.bf16.msra.mxu0 %v2158
      %2196 = vmatprep.subr.bf16.mxu0 0
      %2197 = vmatpush1.bf16.msra.mxu0 %v2159
      %2198 = vmatprep.subr.bf16.mxu0 0
      %2199 = vmatpush1.bf16.msra.mxu0 %v2160
      %2200 = vmatprep.subr.bf16.mxu0 0
      %2201 = vmatpush1.bf16.msra.mxu0 %v2161
      %2202 = vmatprep.subr.bf16.mxu0 0
      %2203 = vmatpush1.bf16.msra.mxu0 %v2162
      %2204 = vmatprep.subr.bf16.mxu0 0
      %2205 = vmatpush1.bf16.msra.mxu0 %v2163
      %2206 = vmatprep.subr.bf16.mxu0 0
      %2207 = vmatpush1.bf16.msra.mxu0 %v2164
      %2208 = vmatprep.subr.bf16.mxu0 0
      %2209 = vmatpush1.bf16.msra.mxu0 %v2165
      %2210 = vmatprep.subr.bf16.mxu0 0
      %2211 = vmatpush1.bf16.msra.mxu0 %v2166
      %2212 = vmatprep.subr.bf16.mxu0 0
      %2213 = vmatpush1.bf16.msra.mxu0 %v2167
      %2214 = vmatprep.subr.bf16.mxu0 0
      %2215 = vmatpush1.bf16.msra.mxu0 %v2168
      %2216 = vmatprep.subr.bf16.mxu0 0
      %2217 = vmatpush1.bf16.msra.mxu0 %v2169
      %2218 = vmatprep.mubr.bf16.mxu0 %v2050
      %2219 = vmatmul.mubr.bf16.gmra.mrb[0].mxu0 %v2049
      %v2220 = vpop.f32.mrb[0].mxu0
      %v2221 = vadd.f32 %v2088, %v2220
      %v2222 = vpop.f32.mrb[0].mxu0
      %v2223 = vpop.f32.mrb[0].mxu0
      %v2224 = vadd.f32 %v2088, %v2223
      %v2225 = vpop.f32.mrb[0].mxu0
      %2226 = vdwg.mxu0
      %v2227 = vlaneseq
      %v2228 = vand.u32 %v2227, 127
      %vm2229 = vcmp.lt.s32.totalorder %v2228, 36
      %v2230 = vsel %vm2229, %v2221, -inf
      %v2231 = vsel %vm2229, %v2224, -inf
      %2232 = vmax.xlane.f32.xlu0 %v2230
      %v2233 = vpop.xlane.xlu0 %2232
      %2234 = vmax.xlane.f32.xlu0 %v2231
      %v2235 = vpop.xlane.xlu0 %2234
      %v2236 = vsub.f32 %v2221, %v2233
      %v2237 = vsub.f32 %v2224, %v2235
      %v2238 = vmul.f32 %v2236, 1.442695
      %v2239 = vpow.pop %v2238
      %v2240 = vmul.f32 %v2237, 1.442695
      %v2241 = vpow.pop %v2240
      %v2242 = vsel %vm2229, %v2239, 0.0
      %v2243 = vsel %vm2229, %v2241, 0.0
      %2244 = vadd.xlane.f32.xlu0 %v2242
      %v2245 = vpop.xlane.xlu0 %2244
      %2246 = vadd.xlane.f32.xlu0 %v2243
      %v2247 = vpop.xlane.xlu0 %2246
      %v2248 = vlog2.pop %v2245
      %v2249 = vmul.f32 %v2248, 0.6931472
      %v2250 = vlog2.pop %v2247
      %v2251 = vmul.f32 %v2250, 0.6931472
      %v2252 = vsub.f32 %v2236, %v2249
      %v2253 = vsub.f32 %v2237, %v2251
      %v2254 = vsel %vm2229, %v2252, %v2221
      %v2255 = vsel %vm2229, %v2253, %v2224
      %2256 = vst [vmem:[%s391] sm:$0xff] %v2254
      %2257 = vst [vmem:[%s391 + $0x8] sm:$0xff] %v2255
      %s2258 = smul.u32 2, %s22
      %p2259 = scmp.lt.s32.totalorder %s2258, 7
      %s2260 = scalar_select %p2259, %s2258, 7
      %s2261 = smul.addr %s2260, 8
      %s2262 = scalar_lea.vmem %s11, %s2261
      // Predicated region
      $region65: #{triple_town_forward.1} parent=63 // pred_check
        %p2263 = pneg %p276
      $region66: #{triple_town_forward.1} parent=63 // pred_check_branch
        %2265 = sbr.rel (%p2263) target = $region68
      $region67: #{triple_town_forward.1} parent=63 // pred_region
        %s2266 = smul.u32 2, %s22
      $region68: #{triple_town_forward.1} parent=63 // pred_fallthru
        _
    $region64: #{triple_town_forward.1} parent=5 // pred_fallthru
      _
    %p2267 = scmp.le.s32.totalorder 2, %s17
    // Predicated region
    $region69: #{triple_town_forward.1} parent=5 // pred_check
      %p2268 = pneg %p2267
    $region70: #{triple_town_forward.1} parent=5 // pred_check_branch
      %2270 = sbr.rel (%p2268) target = $region72
    $region71: #{triple_town_forward.1} parent=5 // pred_region
      %s2271 = ssub.s32 %s17, 2
      // Predicated region
      $region73: #{triple_town_forward.1} parent=71 // pred_check
        %p2272 = pneg %p282
      $region74: #{triple_town_forward.1} parent=71 // pred_check_branch
        %2274 = sbr.rel (%p2272) target = $region76
      $region75: #{triple_town_forward.1} parent=71 // pred_region
        %s2275 = smul.u32 2, %s23
        %p2276 = scmp.lt.s32.totalorder %s2275, 7
        %s2277 = scalar_select %p2276, %s2275, 7
        %s2278 = smul.addr %s2277, 8
        %s2279 = scalar_lea.vmem %s11, %s2278
      $region76: #{triple_town_forward.1} parent=71 // pred_fallthru
        _
    $region72: #{triple_town_forward.1} parent=5 // pred_fallthru
      _
  $region6: #{triple_town_forward.1} parent=0 // loop_footer
    %s21 = sadd.s32 1, %s17
  $region7: #{triple_town_forward.1} parent=0 // loop_footer_branch
    %16 = sbr.rel target = $region3
  $region8: #{triple_town_forward.1} parent=0 // loop_exit
    _

</llo_original>
